<compile_context>
chip_gen: v6e
topology: v6e:2x2x1
jax: 0.10.0
libtpu: 0.0.40
codegen_flags: <defaults>
</compile_context>

<pallas_src>
import functools

import jax
import jax.numpy as jnp
from jax.experimental import pallas as pl
from jax.experimental.pallas import tpu as pltpu

DROPOUT = 0.2        # unused in eval-mode forward
BLOCK_SIZE = 64
N_EMBD = 256

NUM_HEADS = 4
HEAD_SIZE = 64       # head_size * num_heads = 256 -> proj: 256 -> N_EMBD


def _mha_kernel(x_ref, wqkv_ref, wp_ref, bp_ref, o_ref, *, num_heads, head_size):
    # x_ref   : (B_blk, T, C)        f32
    # wqkv_ref: (C, 3*H*hs)          bf16 (Wq pre-scaled by C**-0.5)
    # wp_ref  : (H*hs, N_EMBD)       bf16
    # bp_ref  : (1, N_EMBD)          f32
    # o_ref   : (B_blk, T, N_EMBD)
    b_blk, T, C = x_ref.shape
    H, hs = num_heads, head_size

    # --- one fat QKV projection: bf16 operands, f32 accumulation -------------
    x = x_ref[...].reshape(b_blk * T, C).astype(jnp.bfloat16)
    qkv = jnp.dot(x, wqkv_ref[...], preferred_element_type=jnp.float32)  # (B_blk*T, 3*H*hs)

    row = jax.lax.broadcasted_iota(jnp.int32, (T, T), 0)
    col = jax.lax.broadcasted_iota(jnp.int32, (T, T), 1)
    causal = col <= row                     # tril mask
    neg_big = jnp.float32(-1e30)            # large finite negative (no NaN risk)

    # --- per-(batch-in-block, head) causal attention (static unrolled loops) --
    head_outs = []
    for b in range(b_blk):
        qkv_b = qkv[b * T:(b + 1) * T]      # (T, 3*H*hs), static slice
        outs = []
        for h in range(H):
            q = qkv_b[:, h * hs:(h + 1) * hs]                  # already *scale
            k = qkv_b[:, (H + h) * hs:(H + h + 1) * hs]
            v = qkv_b[:, (2 * H + h) * hs:(2 * H + h + 1) * hs]

            s = jnp.dot(q.astype(jnp.bfloat16), k.astype(jnp.bfloat16).T,
                        preferred_element_type=jnp.float32)    # (T, T)
            s = jnp.where(causal, s, neg_big)

            m = jnp.max(s, axis=-1, keepdims=True)
            p = jnp.exp(s - m)
            p = p * pl.reciprocal(jnp.sum(p, axis=-1, keepdims=True), approx=True)

            outs.append(jnp.dot(p.astype(jnp.bfloat16), v.astype(jnp.bfloat16),
                                preferred_element_type=jnp.float32))   # (T, hs)
        head_outs.append(jnp.concatenate(outs, axis=-1))               # (T, H*hs)

    cat = jnp.concatenate(head_outs, axis=0)                           # (B_blk*T, H*hs)

    # --- single fused output projection (K = H*hs) + bias --------------------
    out = jnp.dot(cat.astype(jnp.bfloat16), wp_ref[...],
                  preferred_element_type=jnp.float32)                  # (B_blk*T, N_EMBD)
    out = out + bp_ref[0]
    o_ref[...] = out.reshape(b_blk, T, -1).astype(o_ref.dtype)


def multi_head_attention(x, wq, wk, wv, wp, bp, *, batch_block=None):
    """x: (B, T, C); wq/wk/wv: (H, C, hs); wp: (H, hs, N_EMBD); bp: (N_EMBD,)."""
    B, T, C = x.shape
    H, _, hs = wq.shape
    n_out = wp.shape[-1]

    if batch_block is None:
        # Keep >=2 grid steps (both v7x TensorCores) while stacking batch rows
        # to fill the MXU M dimension when B grows.
        batch_block = B // 2 if (B >= 2 and B % 2 == 0) else 1
    assert B % batch_block == 0, "batch_block must divide B"

    # One-time weight prep (done by XLA outside the kernel, effectively free):
    # fold softmax scale into Wq, concatenate q|k|v into a single (C, 3*H*hs)
    # bf16 weight, flatten the projection weight to (H*hs, N_EMBD) bf16.
    scale = float(C) ** -0.5                 # PyTorch uses C**-0.5 with C = n_embd
    to_cols = lambda w: jnp.moveaxis(w, 0, 1).reshape(C, H * hs)   # (H,C,hs)->(C,H*hs)
    w_qkv = jnp.concatenate([to_cols(wq * scale), to_cols(wk), to_cols(wv)],
                            axis=1).astype(jnp.bfloat16)           # (C, 3*H*hs)
    w_proj = wp.reshape(H * hs, n_out).astype(jnp.bfloat16)        # (H*hs, N_EMBD)
    bp2 = bp.reshape(1, n_out).astype(jnp.float32)

    kernel = functools.partial(_mha_kernel, num_heads=H, head_size=hs)
    grid = (B // batch_block,)
    return pl.pallas_call(
        kernel,
        out_shape=jax.ShapeDtypeStruct((B, T, n_out), x.dtype),
        grid_spec=pltpu.PrefetchScalarGridSpec(
            num_scalar_prefetch=0,
            grid=grid,
            in_specs=[
                pl.BlockSpec((batch_block, T, C), lambda b: (b, 0, 0)),   # x (per block)
                pl.BlockSpec((C, 3 * H * hs), lambda b: (0, 0)),          # fused W_qkv
                pl.BlockSpec((H * hs, n_out), lambda b: (0, 0)),          # W_proj
                pl.BlockSpec((1, n_out), lambda b: (0, 0)),               # b_proj
            ],
            out_specs=pl.BlockSpec((batch_block, T, n_out), lambda b: (b, 0, 0)),
        ),
        compiler_params=pltpu.CompilerParams(
            dimension_semantics=("parallel",)),
    )(x, w_qkv, w_proj, bp2)


def _reference(x, wq, wk, wv, wp, bp):
    """Pure-JAX f32 reference of the same eval-mode forward (PyTorch semantics)."""
    B, T, C = x.shape
    H = wq.shape[0]
    scale = C ** -0.5
    mask = jnp.tril(jnp.ones((T, T), bool))
    outs = []
    for h in range(H):
        q = x @ wq[h]
        k = x @ wk[h]
        v = x @ wv[h]
        s = (q @ jnp.swapaxes(k, -2, -1)) * scale
        s = jnp.where(mask, s, -jnp.inf)
        p = jax.nn.softmax(s, axis=-1)
        outs.append(p @ v)
    cat = jnp.concatenate(outs, axis=-1)                       # (B, T, H*hs)
    wp_flat = wp.reshape(H * wp.shape[1], wp.shape[-1])        # (H*hs, N_EMBD)
    return cat @ wp_flat + bp


if __name__ == "__main__":
    key = jax.random.PRNGKey(0)
    kx, kq, kk, kv, kp, kb = jax.random.split(key, 6)

    B, T = 2, BLOCK_SIZE  # (2, 64, 256) input
    x = jax.random.normal(kx, (B, T, N_EMBD), jnp.float32)

    init = lambda k, shape: jax.random.normal(k, shape, jnp.float32) * 0.02
    wq = init(kq, (NUM_HEADS, N_EMBD, HEAD_SIZE))
    wk = init(kk, (NUM_HEADS, N_EMBD, HEAD_SIZE))
    wv = init(kv, (NUM_HEADS, N_EMBD, HEAD_SIZE))
    wp = init(kp, (NUM_HEADS, HEAD_SIZE, N_EMBD))
    bp = init(kb, (N_EMBD,))

    out = jax.block_until_ready(multi_head_attention(x, wq, wk, wv, wp, bp))
    ref = _reference(x, wq, wk, wv, wp, bp)
    assert out.shape == (B, T, N_EMBD)
    # bf16 MXU operands with f32 accumulation -> compare vs f32 ref at 2e-2.
    assert jnp.allclose(out, ref, atol=2e-2, rtol=2e-2), "mismatch vs reference"

    # Also exercise the batch-stacked path (M = batch_block*T = 128 fills the MXU).
    x4 = jax.random.normal(kx, (4, T, N_EMBD), jnp.float32)
    out4 = jax.block_until_ready(
        multi_head_attention(x4, wq, wk, wv, wp, bp, batch_block=2))
    ref4 = _reference(x4, wq, wk, wv, wp, bp)
    assert jnp.allclose(out4, ref4, atol=2e-2, rtol=2e-2), "mismatch (stacked batch)"

    print("KERNEL_OK")
</pallas_src>

<mosaic_0001>
module attributes {stable_mosaic.version = 11 : i64} {
  func.func @_mha_kernel(%arg0: i32, %arg1: memref<1x64x256xf32, #tpu.memory_space<vmem>>, %arg2: memref<256x768xbf16, #tpu.memory_space<vmem>>, %arg3: memref<256x256xbf16, #tpu.memory_space<vmem>>, %arg4: memref<1x256xf32, #tpu.memory_space<vmem>>, %arg5: memref<1x64x256xf32, #tpu.memory_space<vmem>>) attributes {dimension_semantics = [#tpu.dimension_semantics<parallel>], iteration_bounds = array<i64: 2>, scalar_prefetch = 0 : i64, scratch_operands = 0 : i64, tpu.core_type = #tpu.core_type<tc>, window_params = [{transform_indices = @transform_0, window_bounds = array<i64: 1, 64, 256>}, {pipeline_mode = #tpu.pipeline_mode<synchronous>, transform_indices = @transform_1, window_bounds = array<i64: 256, 768>}, {pipeline_mode = #tpu.pipeline_mode<synchronous>, transform_indices = @transform_2, window_bounds = array<i64: 256, 256>}, {pipeline_mode = #tpu.pipeline_mode<synchronous>, transform_indices = @transform_3, window_bounds = array<i64: 1, 256>}, {transform_indices = @transform_4, window_bounds = array<i64: 1, 64, 256>}]} {
    %c0 = arith.constant 0 : index
    %c0_0 = arith.constant 0 : index
    %c0_1 = arith.constant 0 : index
    %0 = vector.load %arg1[%c0, %c0_0, %c0_1] : memref<1x64x256xf32, #tpu.memory_space<vmem>>, vector<1x64x256xf32>
    %1 = vector.shape_cast %0 : vector<1x64x256xf32> to vector<64x256xf32>
    %2 = arith.truncf %1 : vector<64x256xf32> to vector<64x256xbf16>
    %c0_2 = arith.constant 0 : index
    %c0_3 = arith.constant 0 : index
    %3 = vector.load %arg2[%c0_2, %c0_3] : memref<256x768xbf16, #tpu.memory_space<vmem>>, vector<256x768xbf16>
    %cst = arith.constant dense<0.000000e+00> : vector<64x768xf32>
    %4 = tpu.matmul %2, %3, %cst {dimension_numbers = #tpu.dot_dimension_numbers<[1], [0], [0], [1], [0, 0, 1, 1], [], []>} : vector<64x256xbf16>, vector<256x768xbf16>, vector<64x768xf32> -> vector<64x768xf32>
    %5 = tpu.iota {dimensions = array<i32: 0>} : vector<64x64xi32>
    %6 = tpu.iota {dimensions = array<i32: 1>} : vector<64x64xi32>
    %7 = arith.cmpi sle, %6, %5 : vector<64x64xi32>
    %8 = vector.extract_strided_slice %4 {offsets = [0, 0], sizes = [64, 64], strides = [1, 1]} : vector<64x768xf32> to vector<64x64xf32>
    %9 = vector.extract_strided_slice %4 {offsets = [0, 256], sizes = [64, 64], strides = [1, 1]} : vector<64x768xf32> to vector<64x64xf32>
    %10 = vector.extract_strided_slice %4 {offsets = [0, 512], sizes = [64, 64], strides = [1, 1]} : vector<64x768xf32> to vector<64x64xf32>
    %11 = arith.truncf %8 : vector<64x64xf32> to vector<64x64xbf16>
    %12 = arith.truncf %9 : vector<64x64xf32> to vector<64x64xbf16>
    %13 = tpu.transpose %12, [1, 0] : vector<64x64xbf16> -> vector<64x64xbf16>
    %cst_4 = arith.constant dense<0.000000e+00> : vector<64x64xf32>
    %14 = tpu.matmul %11, %13, %cst_4 {dimension_numbers = #tpu.dot_dimension_numbers<[1], [0], [0], [1], [0, 0, 1, 1], [], []>} : vector<64x64xbf16>, vector<64x64xbf16>, vector<64x64xf32> -> vector<64x64xf32>
    %cst_5 = arith.constant -1.000000e+30 : f32
    %15 = vector.broadcast %cst_5 : f32 to vector<64x64xf32>
    %16 = arith.select %7, %14, %15 : vector<64x64xi1>, vector<64x64xf32>
    %cst_6 = arith.constant dense<0xFF800000> : vector<64xf32>
    %17 = vector.multi_reduction <maximumf>, %16, %cst_6 [1] : vector<64x64xf32> to vector<64xf32>
    %18 = vector.shape_cast %17 : vector<64xf32> to vector<64x1xf32>
    %19 = vector.broadcast %18 : vector<64x1xf32> to vector<64x64xf32>
    %20 = arith.subf %16, %19 : vector<64x64xf32>
    %21 = math.exp %20 : vector<64x64xf32>
    %cst_7 = arith.constant dense<0.000000e+00> : vector<64xf32>
    %22 = vector.multi_reduction <add>, %21, %cst_7 [1] : vector<64x64xf32> to vector<64xf32>
    %23 = vector.shape_cast %22 : vector<64xf32> to vector<64x1xf32>
    %24 = tpu.reciprocal %23 {approx = true} : vector<64x1xf32> -> vector<64x1xf32>
    %25 = vector.broadcast %24 : vector<64x1xf32> to vector<64x64xf32>
    %26 = arith.mulf %21, %25 : vector<64x64xf32>
    %27 = arith.truncf %26 : vector<64x64xf32> to vector<64x64xbf16>
    %28 = arith.truncf %10 : vector<64x64xf32> to vector<64x64xbf16>
    %cst_8 = arith.constant dense<0.000000e+00> : vector<64x64xf32>
    %29 = tpu.matmul %27, %28, %cst_8 {dimension_numbers = #tpu.dot_dimension_numbers<[1], [0], [0], [1], [0, 0, 1, 1], [], []>} : vector<64x64xbf16>, vector<64x64xbf16>, vector<64x64xf32> -> vector<64x64xf32>
    %30 = vector.extract_strided_slice %4 {offsets = [0, 64], sizes = [64, 64], strides = [1, 1]} : vector<64x768xf32> to vector<64x64xf32>
    %31 = vector.extract_strided_slice %4 {offsets = [0, 320], sizes = [64, 64], strides = [1, 1]} : vector<64x768xf32> to vector<64x64xf32>
    %32 = vector.extract_strided_slice %4 {offsets = [0, 576], sizes = [64, 64], strides = [1, 1]} : vector<64x768xf32> to vector<64x64xf32>
    %33 = arith.truncf %30 : vector<64x64xf32> to vector<64x64xbf16>
    %34 = arith.truncf %31 : vector<64x64xf32> to vector<64x64xbf16>
    %35 = tpu.transpose %34, [1, 0] : vector<64x64xbf16> -> vector<64x64xbf16>
    %cst_9 = arith.constant dense<0.000000e+00> : vector<64x64xf32>
    %36 = tpu.matmul %33, %35, %cst_9 {dimension_numbers = #tpu.dot_dimension_numbers<[1], [0], [0], [1], [0, 0, 1, 1], [], []>} : vector<64x64xbf16>, vector<64x64xbf16>, vector<64x64xf32> -> vector<64x64xf32>
    %cst_10 = arith.constant -1.000000e+30 : f32
    %37 = vector.broadcast %cst_10 : f32 to vector<64x64xf32>
    %38 = arith.select %7, %36, %37 : vector<64x64xi1>, vector<64x64xf32>
    %cst_11 = arith.constant dense<0xFF800000> : vector<64xf32>
    %39 = vector.multi_reduction <maximumf>, %38, %cst_11 [1] : vector<64x64xf32> to vector<64xf32>
    %40 = vector.shape_cast %39 : vector<64xf32> to vector<64x1xf32>
    %41 = vector.broadcast %40 : vector<64x1xf32> to vector<64x64xf32>
    %42 = arith.subf %38, %41 : vector<64x64xf32>
    %43 = math.exp %42 : vector<64x64xf32>
    %cst_12 = arith.constant dense<0.000000e+00> : vector<64xf32>
    %44 = vector.multi_reduction <add>, %43, %cst_12 [1] : vector<64x64xf32> to vector<64xf32>
    %45 = vector.shape_cast %44 : vector<64xf32> to vector<64x1xf32>
    %46 = tpu.reciprocal %45 {approx = true} : vector<64x1xf32> -> vector<64x1xf32>
    %47 = vector.broadcast %46 : vector<64x1xf32> to vector<64x64xf32>
    %48 = arith.mulf %43, %47 : vector<64x64xf32>
    %49 = arith.truncf %48 : vector<64x64xf32> to vector<64x64xbf16>
    %50 = arith.truncf %32 : vector<64x64xf32> to vector<64x64xbf16>
    %cst_13 = arith.constant dense<0.000000e+00> : vector<64x64xf32>
    %51 = tpu.matmul %49, %50, %cst_13 {dimension_numbers = #tpu.dot_dimension_numbers<[1], [0], [0], [1], [0, 0, 1, 1], [], []>} : vector<64x64xbf16>, vector<64x64xbf16>, vector<64x64xf32> -> vector<64x64xf32>
    %52 = vector.extract_strided_slice %4 {offsets = [0, 128], sizes = [64, 64], strides = [1, 1]} : vector<64x768xf32> to vector<64x64xf32>
    %53 = vector.extract_strided_slice %4 {offsets = [0, 384], sizes = [64, 64], strides = [1, 1]} : vector<64x768xf32> to vector<64x64xf32>
    %54 = vector.extract_strided_slice %4 {offsets = [0, 640], sizes = [64, 64], strides = [1, 1]} : vector<64x768xf32> to vector<64x64xf32>
    %55 = arith.truncf %52 : vector<64x64xf32> to vector<64x64xbf16>
    %56 = arith.truncf %53 : vector<64x64xf32> to vector<64x64xbf16>
    %57 = tpu.transpose %56, [1, 0] : vector<64x64xbf16> -> vector<64x64xbf16>
    %cst_14 = arith.constant dense<0.000000e+00> : vector<64x64xf32>
    %58 = tpu.matmul %55, %57, %cst_14 {dimension_numbers = #tpu.dot_dimension_numbers<[1], [0], [0], [1], [0, 0, 1, 1], [], []>} : vector<64x64xbf16>, vector<64x64xbf16>, vector<64x64xf32> -> vector<64x64xf32>
    %cst_15 = arith.constant -1.000000e+30 : f32
    %59 = vector.broadcast %cst_15 : f32 to vector<64x64xf32>
    %60 = arith.select %7, %58, %59 : vector<64x64xi1>, vector<64x64xf32>
    %cst_16 = arith.constant dense<0xFF800000> : vector<64xf32>
    %61 = vector.multi_reduction <maximumf>, %60, %cst_16 [1] : vector<64x64xf32> to vector<64xf32>
    %62 = vector.shape_cast %61 : vector<64xf32> to vector<64x1xf32>
    %63 = vector.broadcast %62 : vector<64x1xf32> to vector<64x64xf32>
    %64 = arith.subf %60, %63 : vector<64x64xf32>
    %65 = math.exp %64 : vector<64x64xf32>
    %cst_17 = arith.constant dense<0.000000e+00> : vector<64xf32>
    %66 = vector.multi_reduction <add>, %65, %cst_17 [1] : vector<64x64xf32> to vector<64xf32>
    %67 = vector.shape_cast %66 : vector<64xf32> to vector<64x1xf32>
    %68 = tpu.reciprocal %67 {approx = true} : vector<64x1xf32> -> vector<64x1xf32>
    %69 = vector.broadcast %68 : vector<64x1xf32> to vector<64x64xf32>
    %70 = arith.mulf %65, %69 : vector<64x64xf32>
    %71 = arith.truncf %70 : vector<64x64xf32> to vector<64x64xbf16>
    %72 = arith.truncf %54 : vector<64x64xf32> to vector<64x64xbf16>
    %cst_18 = arith.constant dense<0.000000e+00> : vector<64x64xf32>
    %73 = tpu.matmul %71, %72, %cst_18 {dimension_numbers = #tpu.dot_dimension_numbers<[1], [0], [0], [1], [0, 0, 1, 1], [], []>} : vector<64x64xbf16>, vector<64x64xbf16>, vector<64x64xf32> -> vector<64x64xf32>
    %74 = vector.extract_strided_slice %4 {offsets = [0, 192], sizes = [64, 64], strides = [1, 1]} : vector<64x768xf32> to vector<64x64xf32>
    %75 = vector.extract_strided_slice %4 {offsets = [0, 448], sizes = [64, 64], strides = [1, 1]} : vector<64x768xf32> to vector<64x64xf32>
    %76 = vector.extract_strided_slice %4 {offsets = [0, 704], sizes = [64, 64], strides = [1, 1]} : vector<64x768xf32> to vector<64x64xf32>
    %77 = arith.truncf %74 : vector<64x64xf32> to vector<64x64xbf16>
    %78 = arith.truncf %75 : vector<64x64xf32> to vector<64x64xbf16>
    %79 = tpu.transpose %78, [1, 0] : vector<64x64xbf16> -> vector<64x64xbf16>
    %cst_19 = arith.constant dense<0.000000e+00> : vector<64x64xf32>
    %80 = tpu.matmul %77, %79, %cst_19 {dimension_numbers = #tpu.dot_dimension_numbers<[1], [0], [0], [1], [0, 0, 1, 1], [], []>} : vector<64x64xbf16>, vector<64x64xbf16>, vector<64x64xf32> -> vector<64x64xf32>
    %cst_20 = arith.constant -1.000000e+30 : f32
    %81 = vector.broadcast %cst_20 : f32 to vector<64x64xf32>
    %82 = arith.select %7, %80, %81 : vector<64x64xi1>, vector<64x64xf32>
    %cst_21 = arith.constant dense<0xFF800000> : vector<64xf32>
    %83 = vector.multi_reduction <maximumf>, %82, %cst_21 [1] : vector<64x64xf32> to vector<64xf32>
    %84 = vector.shape_cast %83 : vector<64xf32> to vector<64x1xf32>
    %85 = vector.broadcast %84 : vector<64x1xf32> to vector<64x64xf32>
    %86 = arith.subf %82, %85 : vector<64x64xf32>
    %87 = math.exp %86 : vector<64x64xf32>
    %cst_22 = arith.constant dense<0.000000e+00> : vector<64xf32>
    %88 = vector.multi_reduction <add>, %87, %cst_22 [1] : vector<64x64xf32> to vector<64xf32>
    %89 = vector.shape_cast %88 : vector<64xf32> to vector<64x1xf32>
    %90 = tpu.reciprocal %89 {approx = true} : vector<64x1xf32> -> vector<64x1xf32>
    %91 = vector.broadcast %90 : vector<64x1xf32> to vector<64x64xf32>
    %92 = arith.mulf %87, %91 : vector<64x64xf32>
    %93 = arith.truncf %92 : vector<64x64xf32> to vector<64x64xbf16>
    %94 = arith.truncf %76 : vector<64x64xf32> to vector<64x64xbf16>
    %cst_23 = arith.constant dense<0.000000e+00> : vector<64x64xf32>
    %95 = tpu.matmul %93, %94, %cst_23 {dimension_numbers = #tpu.dot_dimension_numbers<[1], [0], [0], [1], [0, 0, 1, 1], [], []>} : vector<64x64xbf16>, vector<64x64xbf16>, vector<64x64xf32> -> vector<64x64xf32>
    %96 = tpu.concatenate %29, %51, %73, %95 in 1 : vector<64x64xf32>, vector<64x64xf32>, vector<64x64xf32>, vector<64x64xf32> -> vector<64x256xf32>
    %97 = arith.truncf %96 : vector<64x256xf32> to vector<64x256xbf16>
    %c0_24 = arith.constant 0 : index
    %c0_25 = arith.constant 0 : index
    %98 = vector.load %arg3[%c0_24, %c0_25] : memref<256x256xbf16, #tpu.memory_space<vmem>>, vector<256x256xbf16>
    %cst_26 = arith.constant dense<0.000000e+00> : vector<64x256xf32>
    %99 = tpu.matmul %97, %98, %cst_26 {dimension_numbers = #tpu.dot_dimension_numbers<[1], [0], [0], [1], [0, 0, 1, 1], [], []>} : vector<64x256xbf16>, vector<256x256xbf16>, vector<64x256xf32> -> vector<64x256xf32>
    %c0_27 = arith.constant 0 : index
    %c0_28 = arith.constant 0 : index
    %100 = vector.load %arg4[%c0_27, %c0_28] : memref<1x256xf32, #tpu.memory_space<vmem>>, vector<1x256xf32>
    %101 = vector.shape_cast %100 : vector<1x256xf32> to vector<256xf32>
    %102 = vector.shape_cast %101 : vector<256xf32> to vector<1x256xf32>
    %103 = vector.broadcast %102 : vector<1x256xf32> to vector<64x256xf32>
    %104 = arith.addf %99, %103 : vector<64x256xf32>
    %105 = vector.shape_cast %104 : vector<64x256xf32> to vector<1x64x256xf32>
    %c0_29 = arith.constant 0 : index
    %c0_30 = arith.constant 0 : index
    %c0_31 = arith.constant 0 : index
    %106 = vector.load %arg5[%c0_29, %c0_30, %c0_31] : memref<1x64x256xf32, #tpu.memory_space<vmem>>, vector<1x64x256xf32>
    tpu.vector_store %arg5[%c0_29, %c0_30, %c0_31], %105 {strides = array<i32>} : memref<1x64x256xf32, #tpu.memory_space<vmem>>, vector<1x64x256xf32>,
    return
  }
  func.func @transform_0(%arg0: i32) -> (i32, i32, i32) {
    %c0_i32 = arith.constant 0 : i32
    %c0_i32_0 = arith.constant 0 : i32
    %c0_i32_1 = arith.constant 0 : i32
    return %arg0, %c0_i32, %c0_i32_0 : i32, i32, i32
  }
  func.func @transform_1(%arg0: i32) -> (i32, i32) {
    %c0_i32 = arith.constant 0 : i32
    %c0_i32_0 = arith.constant 0 : i32
    %c0_i32_1 = arith.constant 0 : i32
    return %c0_i32, %c0_i32_0 : i32, i32
  }
  func.func @transform_2(%arg0: i32) -> (i32, i32) {
    %c0_i32 = arith.constant 0 : i32
    %c0_i32_0 = arith.constant 0 : i32
    %c0_i32_1 = arith.constant 0 : i32
    return %c0_i32, %c0_i32_0 : i32, i32
  }
  func.func @transform_3(%arg0: i32) -> (i32, i32) {
    %c0_i32 = arith.constant 0 : i32
    %c0_i32_0 = arith.constant 0 : i32
    %c0_i32_1 = arith.constant 0 : i32
    return %c0_i32, %c0_i32_0 : i32, i32
  }
  func.func @transform_4(%arg0: i32) -> (i32, i32, i32) {
    %c0_i32 = arith.constant 0 : i32
    %c0_i32_0 = arith.constant 0 : i32
    %c0_i32_1 = arith.constant 0 : i32
    return %arg0, %c0_i32, %c0_i32_0 : i32, i32, i32
  }
}

</mosaic_0001>

<llo_original>
// kernel: tpu_custom_call.1
$region0: #{tpu_custom_call.1}
  #allocation0 [shape = 'u32[]', space=smem, size = 0x4, offset = 0x4, fixed_abs, tag = 'smem constant byte address 0x4 - core index']
  #allocation1 [shape = 'u32[144,128]{1,0:T(1,128)}', space=vmem, size = 0x12000, scoped, tag = 'internal scratch']
  %s0 = inlined_call_operand.hbm [shape: f32[2,64,256], index: 0, kind: input, shape index: {}]
  %s1 = inlined_call_operand.hbm [shape: bf16[256,768], index: 1, kind: input, shape index: {}]
  %s2 = inlined_call_operand.hbm [shape: bf16[256,256], index: 2, kind: input, shape index: {}]
  %s3 = inlined_call_operand.vmem [shape: f32[1,256], index: 3, kind: input, shape index: {}]
  %s4 = inlined_call_operand.hbm [shape: f32[2,64,256], index: 4, kind: output, shape index: {}]
  %s5 = sld [smem:[#allocation0]]
  $region61: #{tpu_custom_call.1} parent=0
    _
  %s7 = ssub.s32 1, %s5
  %s8 = scalar_select 0, %s7, %s5
  $region1: #{tpu_custom_call.1} parent=0
    #allocation2 [shape = 'u8[131072]{0}', space=vmem, size = 0x20000, scoped, tag = 'input window, operand 0']
    #allocation3 [shape = 's32[2]{0}', space=sflag, size = 0x8, scoped, tag = 'scoped memory for tpu_custom_call.1']
    #allocation4 [shape = 's32[2]{0}', space=sflag, size = 0x8, scoped, tag = 'scoped memory for tpu_custom_call.1']
    #allocation5 [shape = 'u8[393216]{0}', space=vmem, size = 0x60000, scoped, tag = 'input window, operand 1, single buffered']
    #allocation6 [shape = 's32[1]{0}', space=sflag, size = 0x4, scoped, tag = 'scoped memory for tpu_custom_call.1']
    #allocation7 [shape = 'u8[131072]{0}', space=vmem, size = 0x20000, scoped, tag = 'input window, operand 2, single buffered']
    #allocation8 [shape = 'u8[131072]{0}', space=vmem, size = 0x20000, scoped, tag = 'output window, operand 0']
    %9 = vsyncpa [#allocation3], 0
    %s10 = scalar_lea.sflag [#allocation3], 1
    %11 = vsyncpa %s10, 0
    %12 = vsyncpa [#allocation6], 0
    %13 = vsyncpa [#allocation4], 0
    %s14 = scalar_lea.sflag [#allocation4], 1
    %15 = vsyncpa %s14, 0
    loop: start=0, step=1, limit=4
    $region2: #{tpu_custom_call.1} parent=1 // loop_pre_header
      _
    $region3: #{tpu_custom_call.1} parent=1 // loop_header
      %s17 = sphi 0, %s21
      %p18 = scmp.ge.s32.totalorder %s17, 4
      %s27 = sphi 0, %s29
      %s30 = sphi 0, %s27
      %s31 = sphi 0, %s30
      %s47 = sphi 0, %s31
      %s51 = sphi 0, %s51
      %s53 = sphi 0, %s51
      %s54 = sphi 0, %s53
      %s68 = sphi 0, %s54
      %s72 = sphi 0, %s72
      %s74 = sphi 0, %s72
      %s75 = sphi 0, %s74
      %s89 = sphi 0, %s75
      %s93 = sphi 0, %s93
      %s95 = sphi 0, %s93
      %s96 = sphi 0, %s95
      %s110 = sphi 0, %s96
      %s116 = sphi 0, %s118
      %s119 = sphi 0, %s116
      %s120 = sphi 0, %s119
      %s136 = sphi 0, %s120
    $region4: #{tpu_custom_call.1} parent=1 // loop_header_branch
      %20 = sbr.rel (%p18) target = $region8
    $region5: #{tpu_custom_call.1} parent=1 // loop_body
      %s22 = ssub.s32 %s17, 1
      %s23 = ssub.s32 %s17, 2
      %s24 = sadd.s32 %s17, 1
      %s25 = ssub.s32 %s17, %s24
      %p26 = scmp.eq.s32.totalorder %s25, 0
      %s28 = sadd.s32 %s27, 1
      %s29 = scalar_select %p26, %s27, %s28
      %p32 = pneg %p26
      %p33 = scmp.eq.s32.totalorder %s17, 1
      %p34 = por %p32, %p33
      %p35 = scmp.ne.s32.totalorder %s27, %s30
      %p36 = scmp.eq.s32.totalorder %s17, 0
      %p37 = por %p35, %p36
      %p38 = scmp.ne.s32.totalorder %s27, %s30
      %p39 = scmp.eq.s32.totalorder %s22, 1
      %p40 = por %p38, %p39
      %p41 = scmp.ne.s32.totalorder %s30, %s31
      %p42 = scmp.eq.s32.totalorder %s22, 0
      %p43 = por %p41, %p42
      %p44 = scmp.ne.s32.totalorder %s30, %s31
      %p45 = scmp.eq.s32.totalorder %s23, 1
      %p46 = por %p44, %p45
      %p48 = scmp.ne.s32.totalorder %s31, %s47
      %p49 = scmp.eq.s32.totalorder %s23, 0
      %p50 = por %p48, %p49
      %s52 = sadd.s32 %s51, 1
      %p55 = scmp.eq.s32.totalorder %s17, 1
      %p56 = scmp.ne.s32.totalorder %s51, %s53
      %p57 = scmp.eq.s32.totalorder %s17, 0
      %p58 = por %p56, %p57
      %p59 = scmp.ne.s32.totalorder %s51, %s53
      %p60 = scmp.eq.s32.totalorder %s22, 1
      %p61 = por %p59, %p60
      %p62 = scmp.ne.s32.totalorder %s53, %s54
      %p63 = scmp.eq.s32.totalorder %s22, 0
      %p64 = por %p62, %p63
      %p65 = scmp.ne.s32.totalorder %s53, %s54
      %p66 = scmp.eq.s32.totalorder %s23, 1
      %p67 = por %p65, %p66
      %p69 = scmp.ne.s32.totalorder %s54, %s68
      %p70 = scmp.eq.s32.totalorder %s23, 0
      %p71 = por %p69, %p70
      %s73 = sadd.s32 %s72, 1
      %p76 = scmp.eq.s32.totalorder %s17, 1
      %p77 = scmp.ne.s32.totalorder %s72, %s74
      %p78 = scmp.eq.s32.totalorder %s17, 0
      %p79 = por %p77, %p78
      %p80 = scmp.ne.s32.totalorder %s72, %s74
      %p81 = scmp.eq.s32.totalorder %s22, 1
      %p82 = por %p80, %p81
      %p83 = scmp.ne.s32.totalorder %s74, %s75
      %p84 = scmp.eq.s32.totalorder %s22, 0
      %p85 = por %p83, %p84
      %p86 = scmp.ne.s32.totalorder %s74, %s75
      %p87 = scmp.eq.s32.totalorder %s23, 1
      %p88 = por %p86, %p87
      %p90 = scmp.ne.s32.totalorder %s75, %s89
      %p91 = scmp.eq.s32.totalorder %s23, 0
      %p92 = por %p90, %p91
      %s94 = sadd.s32 %s93, 1
      %p97 = scmp.eq.s32.totalorder %s17, 1
      %p98 = scmp.ne.s32.totalorder %s93, %s95
      %p99 = scmp.eq.s32.totalorder %s17, 0
      %p100 = por %p98, %p99
      %p101 = scmp.ne.s32.totalorder %s93, %s95
      %p102 = scmp.eq.s32.totalorder %s22, 1
      %p103 = por %p101, %p102
      %p104 = scmp.ne.s32.totalorder %s95, %s96
      %p105 = scmp.eq.s32.totalorder %s22, 0
      %p106 = por %p104, %p105
      %p107 = scmp.ne.s32.totalorder %s95, %s96
      %p108 = scmp.eq.s32.totalorder %s23, 1
      %p109 = por %p107, %p108
      %p111 = scmp.ne.s32.totalorder %s96, %s110
      %p112 = scmp.eq.s32.totalorder %s23, 0
      %p113 = por %p111, %p112
      %s114 = ssub.s32 %s17, %s24
      %p115 = scmp.eq.s32.totalorder %s114, 0
      %s117 = sadd.s32 %s116, 1
      %s118 = scalar_select %p115, %s116, %s117
      %p121 = pneg %p115
      %p122 = scmp.eq.s32.totalorder %s17, 1
      %p123 = por %p121, %p122
      %p124 = scmp.ne.s32.totalorder %s116, %s119
      %p125 = scmp.eq.s32.totalorder %s17, 0
      %p126 = por %p124, %p125
      %p127 = scmp.ne.s32.totalorder %s116, %s119
      %p128 = scmp.eq.s32.totalorder %s22, 1
      %p129 = por %p127, %p128
      %p130 = scmp.ne.s32.totalorder %s119, %s120
      %p131 = scmp.eq.s32.totalorder %s22, 0
      %p132 = por %p130, %p131
      %p133 = scmp.ne.s32.totalorder %s119, %s120
      %p134 = scmp.eq.s32.totalorder %s23, 1
      %p135 = por %p133, %p134
      %p137 = scmp.ne.s32.totalorder %s120, %s136
      %p138 = scmp.eq.s32.totalorder %s23, 0
      %p139 = por %p137, %p138
      %p140 = scmp.le.s32.totalorder 1, %s17
      %p141 = scmp.lt.s32.totalorder %s17, 3
      %p142 = pnand %p140, %p141
      %p143 = pneg %p142
      // Predicated region
      $region9: #{tpu_custom_call.1} parent=5 // pred_check
        _
      $region10: #{tpu_custom_call.1} parent=5 // pred_check_branch
        %145 = sbr.rel (%p142) target = $region12
      $region11: #{tpu_custom_call.1} parent=5 // pred_region
        %s146 = ssub.s32 %s17, 1
        // Predicated region
        $region13: #{tpu_custom_call.1} parent=11 // pred_check
          %p147 = pneg %p64
        $region14: #{tpu_custom_call.1} parent=11 // pred_check_branch
          %149 = sbr.rel (%p147) target = $region16
        $region15: #{tpu_custom_call.1} parent=11 // pred_region
          %s151 = ssub.s32 12288, 12288
          %152 = vsyncadd [#allocation6], %s151
          %s153 = sshll.u32 [#allocation5], 4
          %s154 = int_to_ptr.vmem [resolvable:$true] %s153
          %159 = dma.hbm_to_vmem [thread:$0]  %s1, 12288, %s154, [#allocation6], 384, 384, 24
        $region16: #{tpu_custom_call.1} parent=11 // pred_fallthru
          _
        // Predicated region
        $region17: #{tpu_custom_call.1} parent=11 // pred_check
          %p160 = pneg %p85
        $region18: #{tpu_custom_call.1} parent=11 // pred_check_branch
          %162 = sbr.rel (%p160) target = $region20
        $region19: #{tpu_custom_call.1} parent=11 // pred_region
          %s164 = ssub.s32 4096, 4096
          %165 = vsyncadd [#allocation6], %s164
          %s166 = sshll.u32 [#allocation7], 4
          %s167 = int_to_ptr.vmem [resolvable:$true] %s166
          %172 = dma.hbm_to_vmem [thread:$0]  %s2, 4096, %s167, [#allocation6], 128, 128, 8
        $region20: #{tpu_custom_call.1} parent=11 // pred_fallthru
          _
        // Predicated region
        $region21: #{tpu_custom_call.1} parent=11 // pred_check
          %p173 = pneg %p106
        $region22: #{tpu_custom_call.1} parent=11 // pred_check_branch
          %175 = sbr.rel (%p173) target = $region24
        $region23: #{tpu_custom_call.1} parent=11 // pred_region
          _
        $region24: #{tpu_custom_call.1} parent=11 // pred_fallthru
          _
      $region12: #{tpu_custom_call.1} parent=5 // pred_fallthru
        _
      %p176 = scmp.lt.s32.totalorder %s17, 2
      // Predicated region
      $region25: #{tpu_custom_call.1} parent=5 // pred_check
        %p177 = pneg %p176
      $region26: #{tpu_custom_call.1} parent=5 // pred_check_branch
        %179 = sbr.rel (%p177) target = $region28
      $region27: #{tpu_custom_call.1} parent=5 // pred_region
        // Predicated region
        $region29: #{tpu_custom_call.1} parent=27 // pred_check
          %p180 = pneg %p37
        $region30: #{tpu_custom_call.1} parent=27 // pred_check_branch
          %182 = sbr.rel (%p180) target = $region32
        $region31: #{tpu_custom_call.1} parent=27 // pred_region
          %s183 = sand.u32 %s27, 1
          %s184 = scalar_lea.sflag [#allocation3], %s183
          %s185 = sand.u32 %s27, 1
          %s186 = smul.addr %s185, 128
          %s187 = scalar_lea.vmem [#allocation2], %s186
          %s189 = ssub.s32 2048, 2048
          %190 = vsyncadd %s184, %s189
          %s191 = smul.addr %s17, 16
          %s192 = smul.addr %s191, 128
          %s193 = scalar_lea.hbm %s0, %s192
          %s194 = sshll.u32 %s187, 4
          %s195 = int_to_ptr.vmem [resolvable:$true] %s194
          %200 = dma.hbm_to_vmem [thread:$0]  %s193, 2048, %s195, %s184, 256, 256, 16
        $region32: #{tpu_custom_call.1} parent=27 // pred_fallthru
          _
      $region28: #{tpu_custom_call.1} parent=5 // pred_fallthru
        _
      %p201 = scmp.le.s32.totalorder 1, %s17
      %p202 = scmp.lt.s32.totalorder %s17, 3
      %p203 = pnand %p201, %p202
      %p204 = pneg %p203
      // Predicated region
      $region33: #{tpu_custom_call.1} parent=5 // pred_check
        _
      $region34: #{tpu_custom_call.1} parent=5 // pred_check_branch
        %206 = sbr.rel (%p203) target = $region36
      $region35: #{tpu_custom_call.1} parent=5 // pred_region
        %s207 = ssub.s32 %s17, 1
        %s208 = sand.u32 %s30, 1
        %s209 = scalar_lea.sflag [#allocation3], %s208
        %s210 = sand.u32 %s30, 1
        %s211 = smul.addr %s210, 128
        %s212 = scalar_lea.vmem [#allocation2], %s211
        // Predicated region
        $region37: #{tpu_custom_call.1} parent=35 // pred_check
          %p213 = pneg %p43
        $region38: #{tpu_custom_call.1} parent=35 // pred_check_branch
          %215 = sbr.rel (%p213) target = $region40
        $region39: #{tpu_custom_call.1} parent=35 // pred_region
          %216 = dma.done %s209, 2048
        $region40: #{tpu_custom_call.1} parent=35 // pred_fallthru
          _
        // Predicated region
        $region41: #{tpu_custom_call.1} parent=35 // pred_check
          %p217 = pneg %p64
        $region42: #{tpu_custom_call.1} parent=35 // pred_check_branch
          %219 = sbr.rel (%p217) target = $region44
        $region43: #{tpu_custom_call.1} parent=35 // pred_region
          %220 = dma.done [#allocation6], 12288
        $region44: #{tpu_custom_call.1} parent=35 // pred_fallthru
          _
        // Predicated region
        $region45: #{tpu_custom_call.1} parent=35 // pred_check
          %p221 = pneg %p85
        $region46: #{tpu_custom_call.1} parent=35 // pred_check_branch
          %223 = sbr.rel (%p221) target = $region48
        $region47: #{tpu_custom_call.1} parent=35 // pred_region
          %224 = dma.done [#allocation6], 4096
        $region48: #{tpu_custom_call.1} parent=35 // pred_fallthru
          _
        %s225 = sand.u32 %s30, 1
        %s226 = scalar_lea.sflag [#allocation3], %s225
        %s227 = sand.u32 %s30, 1
        %s228 = smul.addr %s227, 128
        %s229 = scalar_lea.vmem [#allocation2], %s228
        %p230 = pneg %p43
        %p231 = pneg %p40
        %p232 = pneg %p64
        %p233 = pneg %p61
        %p234 = pneg %p85
        %p235 = pneg %p82
        %p236 = pneg %p106
        %p237 = pneg %p103
        %p238 = pneg %p132
        %p239 = pneg %p129
        %s240 = sand.u32 %s119, 1
        %s241 = scalar_lea.sflag [#allocation4], %s240
        %s242 = sand.u32 %s119, 1
        %s243 = smul.addr %s242, 128
        %s244 = scalar_lea.vmem [#allocation8], %s243
        %v246 = vld [vmem:[%s212] sm:$0xff]
        %v247 = vld [vmem:[%s212 + $0x8] sm:$0xff]
        %v248 = vld [vmem:[%s212 + $0x10] sm:$0xff]
        %v249 = vld [vmem:[%s212 + $0x18] sm:$0xff]
        %v250 = vld [vmem:[%s212 + $0x20] sm:$0xff]
        %v251 = vld [vmem:[%s212 + $0x28] sm:$0xff]
        %v252 = vld [vmem:[%s212 + $0x30] sm:$0xff]
        %v253 = vld [vmem:[%s212 + $0x38] sm:$0xff]
        %v254 = vld [vmem:[%s212 + $0x40] sm:$0xff]
        %v255 = vld [vmem:[%s212 + $0x48] sm:$0xff]
        %v256 = vld [vmem:[%s212 + $0x50] sm:$0xff]
        %v257 = vld [vmem:[%s212 + $0x58] sm:$0xff]
        %v258 = vld [vmem:[%s212 + $0x60] sm:$0xff]
        %v259 = vld [vmem:[%s212 + $0x68] sm:$0xff]
        %v260 = vld [vmem:[%s212 + $0x70] sm:$0xff]
        %v261 = vld [vmem:[%s212 + $0x78] sm:$0xff]
        %v262 = vpack.c.bf16 %v248, %v246
        %v263 = vpack.c.bf16 %v249, %v247
        %v264 = vpack.c.bf16 %v252, %v250
        %v265 = vpack.c.bf16 %v253, %v251
        %v266 = vpack.c.bf16 %v256, %v254
        %v267 = vpack.c.bf16 %v257, %v255
        %v268 = vpack.c.bf16 %v260, %v258
        %v269 = vpack.c.bf16 %v261, %v259
        %v270 = vld [vmem:[#allocation5] sm:$0xff]
        %v271 = vld [vmem:[#allocation5 + $0x8] sm:$0xff]
        %v272 = vld [vmem:[#allocation5 + $0x10] sm:$0xff]
        %v273 = vld [vmem:[#allocation5 + $0x18] sm:$0xff]
        %v274 = vld [vmem:[#allocation5 + $0x20] sm:$0xff]
        %v275 = vld [vmem:[#allocation5 + $0x28] sm:$0xff]
        %v276 = vld [vmem:[#allocation5 + $0x30] sm:$0xff]
        %v277 = vld [vmem:[#allocation5 + $0x38] sm:$0xff]
        %v278 = vld [vmem:[#allocation5 + $0x40] sm:$0xff]
        %v279 = vld [vmem:[#allocation5 + $0x48] sm:$0xff]
        %v280 = vld [vmem:[#allocation5 + $0x50] sm:$0xff]
        %v281 = vld [vmem:[#allocation5 + $0x58] sm:$0xff]
        %v282 = vld [vmem:[#allocation5 + $0x60] sm:$0xff]
        %v283 = vld [vmem:[#allocation5 + $0x68] sm:$0xff]
        %v284 = vld [vmem:[#allocation5 + $0x70] sm:$0xff]
        %v285 = vld [vmem:[#allocation5 + $0x78] sm:$0xff]
        %v286 = vld [vmem:[#allocation5 + $0x80] sm:$0xff]
        %v287 = vld [vmem:[#allocation5 + $0x88] sm:$0xff]
        %v288 = vld [vmem:[#allocation5 + $0x90] sm:$0xff]
        %v289 = vld [vmem:[#allocation5 + $0x98] sm:$0xff]
        %v290 = vld [vmem:[#allocation5 + $0xa0] sm:$0xff]
        %v291 = vld [vmem:[#allocation5 + $0xa8] sm:$0xff]
        %v292 = vld [vmem:[#allocation5 + $0xb0] sm:$0xff]
        %v293 = vld [vmem:[#allocation5 + $0xb8] sm:$0xff]
        %v294 = vld [vmem:[#allocation5 + $0xc0] sm:$0xff]
        %v295 = vld [vmem:[#allocation5 + $0xc8] sm:$0xff]
        %v296 = vld [vmem:[#allocation5 + $0xd0] sm:$0xff]
        %v297 = vld [vmem:[#allocation5 + $0xd8] sm:$0xff]
        %v298 = vld [vmem:[#allocation5 + $0xe0] sm:$0xff]
        %v299 = vld [vmem:[#allocation5 + $0xe8] sm:$0xff]
        %v300 = vld [vmem:[#allocation5 + $0xf0] sm:$0xff]
        %v301 = vld [vmem:[#allocation5 + $0xf8] sm:$0xff]
        %v302 = vld [vmem:[#allocation5 + $0x100] sm:$0xff]
        %v303 = vld [vmem:[#allocation5 + $0x108] sm:$0xff]
        %v304 = vld [vmem:[#allocation5 + $0x110] sm:$0xff]
        %v305 = vld [vmem:[#allocation5 + $0x118] sm:$0xff]
        %v306 = vld [vmem:[#allocation5 + $0x120] sm:$0xff]
        %v307 = vld [vmem:[#allocation5 + $0x128] sm:$0xff]
        %v308 = vld [vmem:[#allocation5 + $0x130] sm:$0xff]
        %v309 = vld [vmem:[#allocation5 + $0x138] sm:$0xff]
        %v310 = vld [vmem:[#allocation5 + $0x140] sm:$0xff]
        %v311 = vld [vmem:[#allocation5 + $0x148] sm:$0xff]
        %v312 = vld [vmem:[#allocation5 + $0x150] sm:$0xff]
        %v313 = vld [vmem:[#allocation5 + $0x158] sm:$0xff]
        %v314 = vld [vmem:[#allocation5 + $0x160] sm:$0xff]
        %v315 = vld [vmem:[#allocation5 + $0x168] sm:$0xff]
        %v316 = vld [vmem:[#allocation5 + $0x170] sm:$0xff]
        %v317 = vld [vmem:[#allocation5 + $0x178] sm:$0xff]
        %v318 = vld [vmem:[#allocation5 + $0x180] sm:$0xff]
        %v319 = vld [vmem:[#allocation5 + $0x188] sm:$0xff]
        %v320 = vld [vmem:[#allocation5 + $0x190] sm:$0xff]
        %v321 = vld [vmem:[#allocation5 + $0x198] sm:$0xff]
        %v322 = vld [vmem:[#allocation5 + $0x1a0] sm:$0xff]
        %v323 = vld [vmem:[#allocation5 + $0x1a8] sm:$0xff]
        %v324 = vld [vmem:[#allocation5 + $0x1b0] sm:$0xff]
        %v325 = vld [vmem:[#allocation5 + $0x1b8] sm:$0xff]
        %v326 = vld [vmem:[#allocation5 + $0x1c0] sm:$0xff]
        %v327 = vld [vmem:[#allocation5 + $0x1c8] sm:$0xff]
        %v328 = vld [vmem:[#allocation5 + $0x1d0] sm:$0xff]
        %v329 = vld [vmem:[#allocation5 + $0x1d8] sm:$0xff]
        %v330 = vld [vmem:[#allocation5 + $0x1e0] sm:$0xff]
        %v331 = vld [vmem:[#allocation5 + $0x1e8] sm:$0xff]
        %v332 = vld [vmem:[#allocation5 + $0x1f0] sm:$0xff]
        %v333 = vld [vmem:[#allocation5 + $0x1f8] sm:$0xff]
        %v334 = vld [vmem:[#allocation5 + $0x200] sm:$0xff]
        %v335 = vld [vmem:[#allocation5 + $0x208] sm:$0xff]
        %v336 = vld [vmem:[#allocation5 + $0x210] sm:$0xff]
        %v337 = vld [vmem:[#allocation5 + $0x218] sm:$0xff]
        %v338 = vld [vmem:[#allocation5 + $0x220] sm:$0xff]
        %v339 = vld [vmem:[#allocation5 + $0x228] sm:$0xff]
        %v340 = vld [vmem:[#allocation5 + $0x230] sm:$0xff]
        %v341 = vld [vmem:[#allocation5 + $0x238] sm:$0xff]
        %v342 = vld [vmem:[#allocation5 + $0x240] sm:$0xff]
        %v343 = vld [vmem:[#allocation5 + $0x248] sm:$0xff]
        %v344 = vld [vmem:[#allocation5 + $0x250] sm:$0xff]
        %v345 = vld [vmem:[#allocation5 + $0x258] sm:$0xff]
        %v346 = vld [vmem:[#allocation5 + $0x260] sm:$0xff]
        %v347 = vld [vmem:[#allocation5 + $0x268] sm:$0xff]
        %v348 = vld [vmem:[#allocation5 + $0x270] sm:$0xff]
        %v349 = vld [vmem:[#allocation5 + $0x278] sm:$0xff]
        %v350 = vld [vmem:[#allocation5 + $0x280] sm:$0xff]
        %v351 = vld [vmem:[#allocation5 + $0x288] sm:$0xff]
        %v352 = vld [vmem:[#allocation5 + $0x290] sm:$0xff]
        %v353 = vld [vmem:[#allocation5 + $0x298] sm:$0xff]
        %v354 = vld [vmem:[#allocation5 + $0x2a0] sm:$0xff]
        %v355 = vld [vmem:[#allocation5 + $0x2a8] sm:$0xff]
        %v356 = vld [vmem:[#allocation5 + $0x2b0] sm:$0xff]
        %v357 = vld [vmem:[#allocation5 + $0x2b8] sm:$0xff]
        %v358 = vld [vmem:[#allocation5 + $0x2c0] sm:$0xff]
        %v359 = vld [vmem:[#allocation5 + $0x2c8] sm:$0xff]
        %v360 = vld [vmem:[#allocation5 + $0x2d0] sm:$0xff]
        %v361 = vld [vmem:[#allocation5 + $0x2d8] sm:$0xff]
        %v362 = vld [vmem:[#allocation5 + $0x2e0] sm:$0xff]
        %v363 = vld [vmem:[#allocation5 + $0x2e8] sm:$0xff]
        %v364 = vld [vmem:[#allocation5 + $0x2f0] sm:$0xff]
        %v365 = vld [vmem:[#allocation5 + $0x2f8] sm:$0xff]
        %v462 = vunpack.c.l.b16 %v270
        %v463 = vunpack.c.h.b16 %v270
        %v464 = vunpack.c.l.b16 %v271
        %v465 = vunpack.c.h.b16 %v271
        %v466 = vunpack.c.l.b16 %v272
        %v467 = vunpack.c.h.b16 %v272
        %v468 = vunpack.c.l.b16 %v273
        %v469 = vunpack.c.h.b16 %v273
        %v470 = vunpack.c.l.b16 %v274
        %v471 = vunpack.c.h.b16 %v274
        %v472 = vunpack.c.l.b16 %v275
        %v473 = vunpack.c.h.b16 %v275
        %v474 = vunpack.c.l.b16 %v276
        %v475 = vunpack.c.h.b16 %v276
        %v476 = vunpack.c.l.b16 %v277
        %v477 = vunpack.c.h.b16 %v277
        %v478 = vunpack.c.l.b16 %v278
        %v479 = vunpack.c.h.b16 %v278
        %v480 = vunpack.c.l.b16 %v279
        %v481 = vunpack.c.h.b16 %v279
        %v482 = vunpack.c.l.b16 %v280
        %v483 = vunpack.c.h.b16 %v280
        %v484 = vunpack.c.l.b16 %v281
        %v485 = vunpack.c.h.b16 %v281
        %v486 = vunpack.c.l.b16 %v282
        %v487 = vunpack.c.h.b16 %v282
        %v488 = vunpack.c.l.b16 %v283
        %v489 = vunpack.c.h.b16 %v283
        %v490 = vunpack.c.l.b16 %v284
        %v491 = vunpack.c.h.b16 %v284
        %v492 = vunpack.c.l.b16 %v285
        %v493 = vunpack.c.h.b16 %v285
        %v494 = vunpack.c.l.b16 %v286
        %v495 = vunpack.c.h.b16 %v286
        %v496 = vunpack.c.l.b16 %v287
        %v497 = vunpack.c.h.b16 %v287
        %v498 = vunpack.c.l.b16 %v288
        %v499 = vunpack.c.h.b16 %v288
        %v500 = vunpack.c.l.b16 %v289
        %v501 = vunpack.c.h.b16 %v289
        %v502 = vunpack.c.l.b16 %v290
        %v503 = vunpack.c.h.b16 %v290
        %v504 = vunpack.c.l.b16 %v291
        %v505 = vunpack.c.h.b16 %v291
        %v506 = vunpack.c.l.b16 %v292
        %v507 = vunpack.c.h.b16 %v292
        %v508 = vunpack.c.l.b16 %v293
        %v509 = vunpack.c.h.b16 %v293
        %v510 = vunpack.c.l.b16 %v294
        %v511 = vunpack.c.h.b16 %v294
        %v512 = vunpack.c.l.b16 %v295
        %v513 = vunpack.c.h.b16 %v295
        %v514 = vunpack.c.l.b16 %v296
        %v515 = vunpack.c.h.b16 %v296
        %v516 = vunpack.c.l.b16 %v297
        %v517 = vunpack.c.h.b16 %v297
        %v518 = vunpack.c.l.b16 %v298
        %v519 = vunpack.c.h.b16 %v298
        %v520 = vunpack.c.l.b16 %v299
        %v521 = vunpack.c.h.b16 %v299
        %v522 = vunpack.c.l.b16 %v300
        %v523 = vunpack.c.h.b16 %v300
        %v524 = vunpack.c.l.b16 %v301
        %v525 = vunpack.c.h.b16 %v301
        %v526 = vunpack.c.l.b16 %v302
        %v527 = vunpack.c.h.b16 %v302
        %v528 = vunpack.c.l.b16 %v303
        %v529 = vunpack.c.h.b16 %v303
        %v530 = vunpack.c.l.b16 %v304
        %v531 = vunpack.c.h.b16 %v304
        %v532 = vunpack.c.l.b16 %v305
        %v533 = vunpack.c.h.b16 %v305
        %v534 = vunpack.c.l.b16 %v306
        %v535 = vunpack.c.h.b16 %v306
        %v536 = vunpack.c.l.b16 %v307
        %v537 = vunpack.c.h.b16 %v307
        %v538 = vunpack.c.l.b16 %v308
        %v539 = vunpack.c.h.b16 %v308
        %v540 = vunpack.c.l.b16 %v309
        %v541 = vunpack.c.h.b16 %v309
        %v542 = vunpack.c.l.b16 %v310
        %v543 = vunpack.c.h.b16 %v310
        %v544 = vunpack.c.l.b16 %v311
        %v545 = vunpack.c.h.b16 %v311
        %v546 = vunpack.c.l.b16 %v312
        %v547 = vunpack.c.h.b16 %v312
        %v548 = vunpack.c.l.b16 %v313
        %v549 = vunpack.c.h.b16 %v313
        %v550 = vunpack.c.l.b16 %v314
        %v551 = vunpack.c.h.b16 %v314
        %v552 = vunpack.c.l.b16 %v315
        %v553 = vunpack.c.h.b16 %v315
        %v554 = vunpack.c.l.b16 %v316
        %v555 = vunpack.c.h.b16 %v316
        %v556 = vunpack.c.l.b16 %v317
        %v557 = vunpack.c.h.b16 %v317
        %v558 = vunpack.c.l.b16 %v318
        %v559 = vunpack.c.h.b16 %v318
        %v560 = vunpack.c.l.b16 %v319
        %v561 = vunpack.c.h.b16 %v319
        %v562 = vunpack.c.l.b16 %v320
        %v563 = vunpack.c.h.b16 %v320
        %v564 = vunpack.c.l.b16 %v321
        %v565 = vunpack.c.h.b16 %v321
        %v566 = vunpack.c.l.b16 %v322
        %v567 = vunpack.c.h.b16 %v322
        %v568 = vunpack.c.l.b16 %v323
        %v569 = vunpack.c.h.b16 %v323
        %v570 = vunpack.c.l.b16 %v324
        %v571 = vunpack.c.h.b16 %v324
        %v572 = vunpack.c.l.b16 %v325
        %v573 = vunpack.c.h.b16 %v325
        %v574 = vunpack.c.l.b16 %v326
        %v575 = vunpack.c.h.b16 %v326
        %v576 = vunpack.c.l.b16 %v327
        %v577 = vunpack.c.h.b16 %v327
        %v578 = vunpack.c.l.b16 %v328
        %v579 = vunpack.c.h.b16 %v328
        %v580 = vunpack.c.l.b16 %v329
        %v581 = vunpack.c.h.b16 %v329
        %v582 = vunpack.c.l.b16 %v330
        %v583 = vunpack.c.h.b16 %v330
        %v584 = vunpack.c.l.b16 %v331
        %v585 = vunpack.c.h.b16 %v331
        %v586 = vunpack.c.l.b16 %v332
        %v587 = vunpack.c.h.b16 %v332
        %v588 = vunpack.c.l.b16 %v333
        %v589 = vunpack.c.h.b16 %v333
        %v590 = vunpack.c.l.b16 %v334
        %v591 = vunpack.c.h.b16 %v334
        %v592 = vunpack.c.l.b16 %v335
        %v593 = vunpack.c.h.b16 %v335
        %v594 = vunpack.c.l.b16 %v336
        %v595 = vunpack.c.h.b16 %v336
        %v596 = vunpack.c.l.b16 %v337
        %v597 = vunpack.c.h.b16 %v337
        %v598 = vunpack.c.l.b16 %v338
        %v599 = vunpack.c.h.b16 %v338
        %v600 = vunpack.c.l.b16 %v339
        %v601 = vunpack.c.h.b16 %v339
        %v602 = vunpack.c.l.b16 %v340
        %v603 = vunpack.c.h.b16 %v340
        %v604 = vunpack.c.l.b16 %v341
        %v605 = vunpack.c.h.b16 %v341
        %v606 = vunpack.c.l.b16 %v342
        %v607 = vunpack.c.h.b16 %v342
        %v608 = vunpack.c.l.b16 %v343
        %v609 = vunpack.c.h.b16 %v343
        %v610 = vunpack.c.l.b16 %v344
        %v611 = vunpack.c.h.b16 %v344
        %v612 = vunpack.c.l.b16 %v345
        %v613 = vunpack.c.h.b16 %v345
        %v614 = vunpack.c.l.b16 %v346
        %v615 = vunpack.c.h.b16 %v346
        %v616 = vunpack.c.l.b16 %v347
        %v617 = vunpack.c.h.b16 %v347
        %v618 = vunpack.c.l.b16 %v348
        %v619 = vunpack.c.h.b16 %v348
        %v620 = vunpack.c.l.b16 %v349
        %v621 = vunpack.c.h.b16 %v349
        %v622 = vunpack.c.l.b16 %v350
        %v623 = vunpack.c.h.b16 %v350
        %v624 = vunpack.c.l.b16 %v351
        %v625 = vunpack.c.h.b16 %v351
        %v626 = vunpack.c.l.b16 %v352
        %v627 = vunpack.c.h.b16 %v352
        %v628 = vunpack.c.l.b16 %v353
        %v629 = vunpack.c.h.b16 %v353
        %v630 = vunpack.c.l.b16 %v354
        %v631 = vunpack.c.h.b16 %v354
        %v632 = vunpack.c.l.b16 %v355
        %v633 = vunpack.c.h.b16 %v355
        %v634 = vunpack.c.l.b16 %v356
        %v635 = vunpack.c.h.b16 %v356
        %v636 = vunpack.c.l.b16 %v357
        %v637 = vunpack.c.h.b16 %v357
        %v638 = vunpack.c.l.b16 %v358
        %v639 = vunpack.c.h.b16 %v358
        %v640 = vunpack.c.l.b16 %v359
        %v641 = vunpack.c.h.b16 %v359
        %v642 = vunpack.c.l.b16 %v360
        %v643 = vunpack.c.h.b16 %v360
        %v644 = vunpack.c.l.b16 %v361
        %v645 = vunpack.c.h.b16 %v361
        %v646 = vunpack.c.l.b16 %v362
        %v647 = vunpack.c.h.b16 %v362
        %v648 = vunpack.c.l.b16 %v363
        %v649 = vunpack.c.h.b16 %v363
        %v650 = vunpack.c.l.b16 %v364
        %v651 = vunpack.c.h.b16 %v364
        %v652 = vunpack.c.l.b16 %v365
        %v653 = vunpack.c.h.b16 %v365
        %v654 = vpack.c.b16 %v468, %v462
        %v655 = vpack.c.b16 %v469, %v463
        %v656 = vpack.c.b16 %v470, %v464
        %v657 = vpack.c.b16 %v471, %v465
        %v658 = vpack.c.b16 %v472, %v466
        %v659 = vpack.c.b16 %v473, %v467
        %v660 = vpack.c.b16 %v480, %v474
        %v661 = vpack.c.b16 %v481, %v475
        %v662 = vpack.c.b16 %v482, %v476
        %v663 = vpack.c.b16 %v483, %v477
        %v664 = vpack.c.b16 %v484, %v478
        %v665 = vpack.c.b16 %v485, %v479
        %v666 = vpack.c.b16 %v492, %v486
        %v667 = vpack.c.b16 %v493, %v487
        %v668 = vpack.c.b16 %v494, %v488
        %v669 = vpack.c.b16 %v495, %v489
        %v670 = vpack.c.b16 %v496, %v490
        %v671 = vpack.c.b16 %v497, %v491
        %v672 = vpack.c.b16 %v504, %v498
        %v673 = vpack.c.b16 %v505, %v499
        %v674 = vpack.c.b16 %v506, %v500
        %v675 = vpack.c.b16 %v507, %v501
        %v676 = vpack.c.b16 %v508, %v502
        %v677 = vpack.c.b16 %v509, %v503
        %v678 = vpack.c.b16 %v516, %v510
        %v679 = vpack.c.b16 %v517, %v511
        %v680 = vpack.c.b16 %v518, %v512
        %v681 = vpack.c.b16 %v519, %v513
        %v682 = vpack.c.b16 %v520, %v514
        %v683 = vpack.c.b16 %v521, %v515
        %v684 = vpack.c.b16 %v528, %v522
        %v685 = vpack.c.b16 %v529, %v523
        %v686 = vpack.c.b16 %v530, %v524
        %v687 = vpack.c.b16 %v531, %v525
        %v688 = vpack.c.b16 %v532, %v526
        %v689 = vpack.c.b16 %v533, %v527
        %v690 = vpack.c.b16 %v540, %v534
        %v691 = vpack.c.b16 %v541, %v535
        %v692 = vpack.c.b16 %v542, %v536
        %v693 = vpack.c.b16 %v543, %v537
        %v694 = vpack.c.b16 %v544, %v538
        %v695 = vpack.c.b16 %v545, %v539
        %v696 = vpack.c.b16 %v552, %v546
        %v697 = vpack.c.b16 %v553, %v547
        %v698 = vpack.c.b16 %v554, %v548
        %v699 = vpack.c.b16 %v555, %v549
        %v700 = vpack.c.b16 %v556, %v550
        %v701 = vpack.c.b16 %v557, %v551
        %v702 = vpack.c.b16 %v564, %v558
        %v703 = vpack.c.b16 %v565, %v559
        %v704 = vpack.c.b16 %v566, %v560
        %v705 = vpack.c.b16 %v567, %v561
        %v706 = vpack.c.b16 %v568, %v562
        %v707 = vpack.c.b16 %v569, %v563
        %v708 = vpack.c.b16 %v576, %v570
        %v709 = vpack.c.b16 %v577, %v571
        %v710 = vpack.c.b16 %v578, %v572
        %v711 = vpack.c.b16 %v579, %v573
        %v712 = vpack.c.b16 %v580, %v574
        %v713 = vpack.c.b16 %v581, %v575
        %v714 = vpack.c.b16 %v588, %v582
        %v715 = vpack.c.b16 %v589, %v583
        %v716 = vpack.c.b16 %v590, %v584
        %v717 = vpack.c.b16 %v591, %v585
        %v718 = vpack.c.b16 %v592, %v586
        %v719 = vpack.c.b16 %v593, %v587
        %v720 = vpack.c.b16 %v600, %v594
        %v721 = vpack.c.b16 %v601, %v595
        %v722 = vpack.c.b16 %v602, %v596
        %v723 = vpack.c.b16 %v603, %v597
        %v724 = vpack.c.b16 %v604, %v598
        %v725 = vpack.c.b16 %v605, %v599
        %v726 = vpack.c.b16 %v612, %v606
        %v727 = vpack.c.b16 %v613, %v607
        %v728 = vpack.c.b16 %v614, %v608
        %v729 = vpack.c.b16 %v615, %v609
        %v730 = vpack.c.b16 %v616, %v610
        %v731 = vpack.c.b16 %v617, %v611
        %v732 = vpack.c.b16 %v624, %v618
        %v733 = vpack.c.b16 %v625, %v619
        %v734 = vpack.c.b16 %v626, %v620
        %v735 = vpack.c.b16 %v627, %v621
        %v736 = vpack.c.b16 %v628, %v622
        %v737 = vpack.c.b16 %v629, %v623
        %v738 = vpack.c.b16 %v636, %v630
        %v739 = vpack.c.b16 %v637, %v631
        %v740 = vpack.c.b16 %v638, %v632
        %v741 = vpack.c.b16 %v639, %v633
        %v742 = vpack.c.b16 %v640, %v634
        %v743 = vpack.c.b16 %v641, %v635
        %v744 = vpack.c.b16 %v648, %v642
        %v745 = vpack.c.b16 %v649, %v643
        %v746 = vpack.c.b16 %v650, %v644
        %v747 = vpack.c.b16 %v651, %v645
        %v748 = vpack.c.b16 %v652, %v646
        %v749 = vpack.c.b16 %v653, %v647
        %846 = vmatprep.subr.bf16.mxu0 %v697
        %847 = vmatpush1.bf16.msra.mxu0 %v696
        %848 = vmatprep.subr.bf16.mxu0 %v691
        %849 = vmatpush1.bf16.msra.mxu0 %v690
        %850 = vmatprep.subr.bf16.mxu0 %v685
        %851 = vmatpush1.bf16.msra.mxu0 %v684
        %852 = vmatprep.subr.bf16.mxu0 %v679
        %853 = vmatpush1.bf16.msra.mxu0 %v678
        %854 = vmatprep.subr.bf16.mxu0 %v673
        %855 = vmatpush1.bf16.msra.mxu0 %v672
        %856 = vmatprep.subr.bf16.mxu0 %v667
        %857 = vmatpush1.bf16.msra.mxu0 %v666
        %858 = vmatprep.subr.bf16.mxu0 %v661
        %859 = vmatpush1.bf16.msra.mxu0 %v660
        %860 = vmatprep.subr.bf16.mxu0 %v655
        %861 = vmatpush1.bf16.msra.mxu0 %v654
        %862 = vmatprep.subr.bf16.mxu0 %v745
        %863 = vmatpush2.bf16.msra.mxu0 %v744
        %864 = vmatprep.subr.bf16.mxu0 %v739
        %865 = vmatpush2.bf16.msra.mxu0 %v738
        %866 = vmatprep.subr.bf16.mxu0 %v733
        %867 = vmatpush2.bf16.msra.mxu0 %v732
        %868 = vmatprep.subr.bf16.mxu0 %v727
        %869 = vmatpush2.bf16.msra.mxu0 %v726
        %870 = vmatprep.subr.bf16.mxu0 %v721
        %871 = vmatpush2.bf16.msra.mxu0 %v720
        %872 = vmatprep.subr.bf16.mxu0 %v715
        %873 = vmatpush2.bf16.msra.mxu0 %v714
        %874 = vmatprep.subr.bf16.mxu0 %v709
        %875 = vmatpush2.bf16.msra.mxu0 %v708
        %876 = vmatprep.subr.bf16.mxu0 %v703
        %877 = vmatpush2.bf16.msra.mxu0 %v702
        %878 = vmatprep.mubr.bf16.mxu0 %v263
        %879 = vmatmul.mubr.bf16.gmra.mxu0 %v262
        %v880 = vpop.f32.mrf.mxu0
        %v881 = vadd.f32 0.0, %v880
        %v882 = vpop.f32.mrf.mxu0
        %v883 = vadd.f32 0.0, %v882
        %v884 = vpop.f32.mrf.mxu0
        %v885 = vadd.f32 0.0, %v884
        %v886 = vpop.f32.mrf.mxu0
        %v887 = vadd.f32 0.0, %v886
        %888 = vmatprep.mubr.bf16.mxu0 %v265
        %889 = vmatmul.mubr.bf16.gmra.mxu0 %v264
        %v890 = vpop.f32.mrf.mxu0
        %v891 = vadd.f32 0.0, %v890
        %v892 = vpop.f32.mrf.mxu0
        %v893 = vadd.f32 0.0, %v892
        %v894 = vpop.f32.mrf.mxu0
        %v895 = vadd.f32 0.0, %v894
        %v896 = vpop.f32.mrf.mxu0
        %v897 = vadd.f32 0.0, %v896
        %898 = vmatprep.mubr.bf16.mxu0 %v267
        %899 = vmatmul.mubr.bf16.gmra.mxu0 %v266
        %v900 = vpop.f32.mrf.mxu0
        %v901 = vadd.f32 0.0, %v900
        %v902 = vpop.f32.mrf.mxu0
        %v903 = vadd.f32 0.0, %v902
        %v904 = vpop.f32.mrf.mxu0
        %v905 = vadd.f32 0.0, %v904
        %v906 = vpop.f32.mrf.mxu0
        %v907 = vadd.f32 0.0, %v906
        %908 = vmatprep.mubr.bf16.mxu0 %v269
        %909 = vmatmul.mubr.bf16.gmra.mxu0 %v268
        %v910 = vpop.f32.mrf.mxu0
        %v911 = vadd.f32 0.0, %v910
        %v912 = vpop.f32.mrf.mxu0
        %v913 = vadd.f32 0.0, %v912
        %v914 = vpop.f32.mrf.mxu0
        %v915 = vadd.f32 0.0, %v914
        %v916 = vpop.f32.mrf.mxu0
        %v917 = vadd.f32 0.0, %v916
        %918 = vdwg.mxu0
        %919 = vmatprep.subr.bf16.mxu0 %v699
        %920 = vmatpush1.bf16.msra.mxu0 %v698
        %921 = vmatprep.subr.bf16.mxu0 %v693
        %922 = vmatpush1.bf16.msra.mxu0 %v692
        %923 = vmatprep.subr.bf16.mxu0 %v687
        %924 = vmatpush1.bf16.msra.mxu0 %v686
        %925 = vmatprep.subr.bf16.mxu0 %v681
        %926 = vmatpush1.bf16.msra.mxu0 %v680
        %927 = vmatprep.subr.bf16.mxu0 %v675
        %928 = vmatpush1.bf16.msra.mxu0 %v674
        %929 = vmatprep.subr.bf16.mxu0 %v669
        %930 = vmatpush1.bf16.msra.mxu0 %v668
        %931 = vmatprep.subr.bf16.mxu0 %v663
        %932 = vmatpush1.bf16.msra.mxu0 %v662
        %933 = vmatprep.subr.bf16.mxu0 %v657
        %934 = vmatpush1.bf16.msra.mxu0 %v656
        %935 = vmatprep.subr.bf16.mxu0 %v747
        %936 = vmatpush2.bf16.msra.mxu0 %v746
        %937 = vmatprep.subr.bf16.mxu0 %v741
        %938 = vmatpush2.bf16.msra.mxu0 %v740
        %939 = vmatprep.subr.bf16.mxu0 %v735
        %940 = vmatpush2.bf16.msra.mxu0 %v734
        %941 = vmatprep.subr.bf16.mxu0 %v729
        %942 = vmatpush2.bf16.msra.mxu0 %v728
        %943 = vmatprep.subr.bf16.mxu0 %v723
        %944 = vmatpush2.bf16.msra.mxu0 %v722
        %945 = vmatprep.subr.bf16.mxu0 %v717
        %946 = vmatpush2.bf16.msra.mxu0 %v716
        %947 = vmatprep.subr.bf16.mxu0 %v711
        %948 = vmatpush2.bf16.msra.mxu0 %v710
        %949 = vmatprep.subr.bf16.mxu0 %v705
        %950 = vmatpush2.bf16.msra.mxu0 %v704
        %951 = vmatprep.mubr.bf16.mxu0 %v263
        %952 = vmatmul.mubr.bf16.gmra.mxu0 %v262
        %v953 = vpop.f32.mrf.mxu0
        %v954 = vadd.f32 0.0, %v953
        %v955 = vpop.f32.mrf.mxu0
        %v956 = vadd.f32 0.0, %v955
        %v957 = vpop.f32.mrf.mxu0
        %v958 = vadd.f32 0.0, %v957
        %v959 = vpop.f32.mrf.mxu0
        %v960 = vadd.f32 0.0, %v959
        %961 = vmatprep.mubr.bf16.mxu0 %v265
        %962 = vmatmul.mubr.bf16.gmra.mxu0 %v264
        %v963 = vpop.f32.mrf.mxu0
        %v964 = vadd.f32 0.0, %v963
        %v965 = vpop.f32.mrf.mxu0
        %v966 = vadd.f32 0.0, %v965
        %v967 = vpop.f32.mrf.mxu0
        %v968 = vadd.f32 0.0, %v967
        %v969 = vpop.f32.mrf.mxu0
        %v970 = vadd.f32 0.0, %v969
        %971 = vmatprep.mubr.bf16.mxu0 %v267
        %972 = vmatmul.mubr.bf16.gmra.mxu0 %v266
        %v973 = vpop.f32.mrf.mxu0
        %v974 = vadd.f32 0.0, %v973
        %v975 = vpop.f32.mrf.mxu0
        %v976 = vadd.f32 0.0, %v975
        %v977 = vpop.f32.mrf.mxu0
        %v978 = vadd.f32 0.0, %v977
        %v979 = vpop.f32.mrf.mxu0
        %v980 = vadd.f32 0.0, %v979
        %981 = vmatprep.mubr.bf16.mxu0 %v269
        %982 = vmatmul.mubr.bf16.gmra.mxu0 %v268
        %v983 = vpop.f32.mrf.mxu0
        %v984 = vadd.f32 0.0, %v983
        %v985 = vpop.f32.mrf.mxu0
        %v986 = vadd.f32 0.0, %v985
        %v987 = vpop.f32.mrf.mxu0
        %v988 = vadd.f32 0.0, %v987
        %v989 = vpop.f32.mrf.mxu0
        %v990 = vadd.f32 0.0, %v989
        %991 = vdwg.mxu0
        %992 = vmatprep.subr.bf16.mxu0 %v701
        %993 = vmatpush1.bf16.msra.mxu0 %v700
        %994 = vmatprep.subr.bf16.mxu0 %v695
        %995 = vmatpush1.bf16.msra.mxu0 %v694
        %996 = vmatprep.subr.bf16.mxu0 %v689
        %997 = vmatpush1.bf16.msra.mxu0 %v688
        %998 = vmatprep.subr.bf16.mxu0 %v683
        %999 = vmatpush1.bf16.msra.mxu0 %v682
        %1000 = vmatprep.subr.bf16.mxu0 %v677
        %1001 = vmatpush1.bf16.msra.mxu0 %v676
        %1002 = vmatprep.subr.bf16.mxu0 %v671
        %1003 = vmatpush1.bf16.msra.mxu0 %v670
        %1004 = vmatprep.subr.bf16.mxu0 %v665
        %1005 = vmatpush1.bf16.msra.mxu0 %v664
        %1006 = vmatprep.subr.bf16.mxu0 %v659
        %1007 = vmatpush1.bf16.msra.mxu0 %v658
        %1008 = vmatprep.subr.bf16.mxu0 %v749
        %1009 = vmatpush2.bf16.msra.mxu0 %v748
        %1010 = vmatprep.subr.bf16.mxu0 %v743
        %1011 = vmatpush2.bf16.msra.mxu0 %v742
        %1012 = vmatprep.subr.bf16.mxu0 %v737
        %1013 = vmatpush2.bf16.msra.mxu0 %v736
        %1014 = vmatprep.subr.bf16.mxu0 %v731
        %1015 = vmatpush2.bf16.msra.mxu0 %v730
        %1016 = vmatprep.subr.bf16.mxu0 %v725
        %1017 = vmatpush2.bf16.msra.mxu0 %v724
        %1018 = vmatprep.subr.bf16.mxu0 %v719
        %1019 = vmatpush2.bf16.msra.mxu0 %v718
        %1020 = vmatprep.subr.bf16.mxu0 %v713
        %1021 = vmatpush2.bf16.msra.mxu0 %v712
        %1022 = vmatprep.subr.bf16.mxu0 %v707
        %1023 = vmatpush2.bf16.msra.mxu0 %v706
        %1024 = vmatprep.mubr.bf16.mxu0 %v263
        %1025 = vmatmul.mubr.bf16.gmra.mxu0 %v262
        %v1026 = vpop.f32.mrf.mxu0
        %v1027 = vadd.f32 0.0, %v1026
        %v1028 = vpop.f32.mrf.mxu0
        %v1029 = vadd.f32 0.0, %v1028
        %v1030 = vpop.f32.mrf.mxu0
        %v1031 = vadd.f32 0.0, %v1030
        %v1032 = vpop.f32.mrf.mxu0
        %v1033 = vadd.f32 0.0, %v1032
        %1034 = vmatprep.mubr.bf16.mxu0 %v265
        %1035 = vmatmul.mubr.bf16.gmra.mxu0 %v264
        %v1036 = vpop.f32.mrf.mxu0
        %v1037 = vadd.f32 0.0, %v1036
        %v1038 = vpop.f32.mrf.mxu0
        %v1039 = vadd.f32 0.0, %v1038
        %v1040 = vpop.f32.mrf.mxu0
        %v1041 = vadd.f32 0.0, %v1040
        %v1042 = vpop.f32.mrf.mxu0
        %v1043 = vadd.f32 0.0, %v1042
        %1044 = vmatprep.mubr.bf16.mxu0 %v267
        %1045 = vmatmul.mubr.bf16.gmra.mxu0 %v266
        %v1046 = vpop.f32.mrf.mxu0
        %v1047 = vadd.f32 0.0, %v1046
        %v1048 = vpop.f32.mrf.mxu0
        %v1049 = vadd.f32 0.0, %v1048
        %v1050 = vpop.f32.mrf.mxu0
        %v1051 = vadd.f32 0.0, %v1050
        %v1052 = vpop.f32.mrf.mxu0
        %v1053 = vadd.f32 0.0, %v1052
        %1054 = vmatprep.mubr.bf16.mxu0 %v269
        %1055 = vmatmul.mubr.bf16.gmra.mxu0 %v268
        %v1056 = vpop.f32.mrf.mxu0
        %v1057 = vadd.f32 0.0, %v1056
        %v1058 = vpop.f32.mrf.mxu0
        %v1059 = vadd.f32 0.0, %v1058
        %v1060 = vpop.f32.mrf.mxu0
        %v1061 = vadd.f32 0.0, %v1060
        %v1062 = vpop.f32.mrf.mxu0
        %v1063 = vadd.f32 0.0, %v1062
        %1064 = vdwg.mxu0
        %v1065 = vlaneseq
        %v1066 = vshrl.u32 %v1065, 7
        %v1067 = vadd.s32 %v1066, 8
        %v1068 = vadd.s32 %v1066, 16
        %v1069 = vadd.s32 %v1066, 24
        %v1070 = vadd.s32 %v1066, 32
        %v1071 = vadd.s32 %v1066, 40
        %v1072 = vadd.s32 %v1066, 48
        %v1073 = vadd.s32 %v1066, 56
        %v1074 = vlaneseq
        %v1075 = vand.u32 %v1074, 127
        %vm1076 = vcmp.le.s32.totalorder %v1075, %v1066
        %vm1077 = vcmp.le.s32.totalorder %v1075, %v1067
        %vm1078 = vcmp.le.s32.totalorder %v1075, %v1068
        %vm1079 = vcmp.le.s32.totalorder %v1075, %v1069
        %vm1080 = vcmp.le.s32.totalorder %v1075, %v1070
        %vm1081 = vcmp.le.s32.totalorder %v1075, %v1071
        %vm1082 = vcmp.le.s32.totalorder %v1075, %v1072
        %vm1083 = vcmp.le.s32.totalorder %v1075, %v1073
        %v1084 = vpack.c.bf16 %v885, %v881
        %v1085 = vpack.c.bf16 %v895, %v891
        %v1086 = vpack.c.bf16 %v905, %v901
        %v1087 = vpack.c.bf16 %v915, %v911
        %v1088 = vpack.c.bf16 %v958, %v954
        %v1089 = vpack.c.bf16 %v968, %v964
        %v1090 = vpack.c.bf16 %v978, %v974
        %v1091 = vpack.c.bf16 %v988, %v984
        %vm1092 = vcmask 523264
        %v1094 = vsel %vm1092, %v1084, 0
        %v1097 = vsel %vm1092, %v1085, 0
        %v1100 = vsel %vm1092, %v1086, 0
        %v1103 = vsel %vm1092, %v1087, 0
        %v1106 = vsel %vm1092, %v1088, 0
        %v1109 = vsel %vm1092, %v1089, 0
        %v1112 = vsel %vm1092, %v1090, 0
        %v1115 = vsel %vm1092, %v1091, 0
        %1117 = vmatprep.subr.bf16.mxu0 0
        %1118 = vmatpush1.bf16.xpose.msra.mxu0 0
        %1119 = vmatprep.subr.bf16.mxu0 0
        %1120 = vmatpush1.bf16.xpose.msra.mxu0 0
        %1121 = vmatprep.subr.bf16.mxu0 0
        %1122 = vmatpush1.bf16.xpose.msra.mxu0 0
        %1123 = vmatprep.subr.bf16.mxu0 0
        %1124 = vmatpush1.bf16.xpose.msra.mxu0 0
        %1125 = vmatprep.subr.bf16.mxu0 0
        %1126 = vmatpush1.bf16.xpose.msra.mxu0 %v1115
        %1127 = vmatprep.subr.bf16.mxu0 0
        %1128 = vmatpush1.bf16.xpose.msra.mxu0 %v1112
        %1129 = vmatprep.subr.bf16.mxu0 0
        %1130 = vmatpush1.bf16.xpose.msra.mxu0 %v1109
        %1131 = vmatprep.subr.bf16.mxu0 0
        %1132 = vmatpush1.bf16.xpose.msra.mxu0 %v1106
        %1133 = vmatprep.subr.bf16.mxu0 0
        %1134 = vmatpush2.bf16.xpose.msra.mxu0 0
        %1135 = vmatprep.subr.bf16.mxu0 0
        %1136 = vmatpush2.bf16.xpose.msra.mxu0 0
        %1137 = vmatprep.subr.bf16.mxu0 0
        %1138 = vmatpush2.bf16.xpose.msra.mxu0 0
        %1139 = vmatprep.subr.bf16.mxu0 0
        %1140 = vmatpush2.bf16.xpose.msra.mxu0 0
        %1141 = vmatprep.subr.bf16.mxu0 0
        %1142 = vmatpush2.bf16.xpose.msra.mxu0 0
        %1143 = vmatprep.subr.bf16.mxu0 0
        %1144 = vmatpush2.bf16.xpose.msra.mxu0 0
        %1145 = vmatprep.subr.bf16.mxu0 0
        %1146 = vmatpush2.bf16.xpose.msra.mxu0 0
        %1147 = vmatprep.subr.bf16.mxu0 0
        %1148 = vmatpush2.bf16.xpose.msra.mxu0 0
        %1149 = vmatprep.mubr.bf16.mxu0 0
        %1150 = vmatmul.mubr.bf16.gmra.mxu0 %v1094
        %v1151 = vpop.f32.mrf.mxu0
        %v1152 = vadd.f32 0.0, %v1151
        %v1153 = vpop.f32.mrf.mxu0
        %v1154 = vpop.f32.mrf.mxu0
        %v1155 = vadd.f32 0.0, %v1154
        %v1156 = vpop.f32.mrf.mxu0
        %1157 = vmatprep.mubr.bf16.mxu0 0
        %1158 = vmatmul.mubr.bf16.gmra.mxu0 %v1097
        %v1159 = vpop.f32.mrf.mxu0
        %v1160 = vadd.f32 0.0, %v1159
        %v1161 = vpop.f32.mrf.mxu0
        %v1162 = vpop.f32.mrf.mxu0
        %v1163 = vadd.f32 0.0, %v1162
        %v1164 = vpop.f32.mrf.mxu0
        %1165 = vmatprep.mubr.bf16.mxu0 0
        %1166 = vmatmul.mubr.bf16.gmra.mxu0 %v1100
        %v1167 = vpop.f32.mrf.mxu0
        %v1168 = vadd.f32 0.0, %v1167
        %v1169 = vpop.f32.mrf.mxu0
        %v1170 = vpop.f32.mrf.mxu0
        %v1171 = vadd.f32 0.0, %v1170
        %v1172 = vpop.f32.mrf.mxu0
        %1173 = vmatprep.mubr.bf16.mxu0 0
        %1174 = vmatmul.mubr.bf16.gmra.mxu0 %v1103
        %v1175 = vpop.f32.mrf.mxu0
        %v1176 = vadd.f32 0.0, %v1175
        %v1177 = vpop.f32.mrf.mxu0
        %v1178 = vpop.f32.mrf.mxu0
        %v1179 = vadd.f32 0.0, %v1178
        %v1180 = vpop.f32.mrf.mxu0
        %1181 = vdwg.mxu0
        %v1182 = vsel %vm1076, %v1152, -1e+30
        %v1183 = vsel %vm1077, %v1155, -1e+30
        %v1184 = vsel %vm1078, %v1160, -1e+30
        %v1185 = vsel %vm1079, %v1163, -1e+30
        %v1186 = vsel %vm1080, %v1168, -1e+30
        %v1187 = vsel %vm1081, %v1171, -1e+30
        %v1188 = vsel %vm1082, %v1176, -1e+30
        %v1189 = vsel %vm1083, %v1179, -1e+30
        %v1190 = vsel %vm1092, %v1182, -inf
        %1191 = vmax.xlane.f32.xlu0 %v1190
        %v1192 = vpop.xlane.xlu0 %1191
        %v1193 = vsel %vm1092, %v1183, -inf
        %1194 = vmax.xlane.f32.xlu0 %v1193
        %v1195 = vpop.xlane.xlu0 %1194
        %v1196 = vsel %vm1092, %v1184, -inf
        %1197 = vmax.xlane.f32.xlu0 %v1196
        %v1198 = vpop.xlane.xlu0 %1197
        %v1199 = vsel %vm1092, %v1185, -inf
        %1200 = vmax.xlane.f32.xlu0 %v1199
        %v1201 = vpop.xlane.xlu0 %1200
        %v1202 = vsel %vm1092, %v1186, -inf
        %1203 = vmax.xlane.f32.xlu0 %v1202
        %v1204 = vpop.xlane.xlu0 %1203
        %v1205 = vsel %vm1092, %v1187, -inf
        %1206 = vmax.xlane.f32.xlu0 %v1205
        %v1207 = vpop.xlane.xlu0 %1206
        %v1208 = vsel %vm1092, %v1188, -inf
        %1209 = vmax.xlane.f32.xlu0 %v1208
        %v1210 = vpop.xlane.xlu0 %1209
        %v1211 = vsel %vm1092, %v1189, -inf
        %1212 = vmax.xlane.f32.xlu0 %v1211
        %v1213 = vpop.xlane.xlu0 %1212
        %v1214 = vsub.f32 %v1182, %v1192
        %v1215 = vsub.f32 %v1183, %v1195
        %v1216 = vsub.f32 %v1184, %v1198
        %v1217 = vsub.f32 %v1185, %v1201
        %v1218 = vsub.f32 %v1186, %v1204
        %v1219 = vsub.f32 %v1187, %v1207
        %v1220 = vsub.f32 %v1188, %v1210
        %v1221 = vsub.f32 %v1189, %v1213
        %v1222 = vmul.f32 %v1214, 1.442695
        %v1223 = vpow.pop %v1222
        %v1224 = vmul.f32 %v1215, 1.442695
        %v1225 = vpow.pop %v1224
        %v1226 = vmul.f32 %v1216, 1.442695
        %v1227 = vpow.pop %v1226
        %v1228 = vmul.f32 %v1217, 1.442695
        %v1229 = vpow.pop %v1228
        %v1230 = vmul.f32 %v1218, 1.442695
        %v1231 = vpow.pop %v1230
        %v1232 = vmul.f32 %v1219, 1.442695
        %v1233 = vpow.pop %v1232
        %v1234 = vmul.f32 %v1220, 1.442695
        %v1235 = vpow.pop %v1234
        %v1236 = vmul.f32 %v1221, 1.442695
        %v1237 = vpow.pop %v1236
        %v1238 = vsel %vm1092, %v1223, 0.0
        %1239 = vadd.xlane.f32.xlu0 %v1238
        %v1240 = vpop.xlane.xlu0 %1239
        %v1241 = vsel %vm1092, %v1225, 0.0
        %1242 = vadd.xlane.f32.xlu0 %v1241
        %v1243 = vpop.xlane.xlu0 %1242
        %v1244 = vsel %vm1092, %v1227, 0.0
        %1245 = vadd.xlane.f32.xlu0 %v1244
        %v1246 = vpop.xlane.xlu0 %1245
        %v1247 = vsel %vm1092, %v1229, 0.0
        %1248 = vadd.xlane.f32.xlu0 %v1247
        %v1249 = vpop.xlane.xlu0 %1248
        %v1250 = vsel %vm1092, %v1231, 0.0
        %1251 = vadd.xlane.f32.xlu0 %v1250
        %v1252 = vpop.xlane.xlu0 %1251
        %v1253 = vsel %vm1092, %v1233, 0.0
        %1254 = vadd.xlane.f32.xlu0 %v1253
        %v1255 = vpop.xlane.xlu0 %1254
        %v1256 = vsel %vm1092, %v1235, 0.0
        %1257 = vadd.xlane.f32.xlu0 %v1256
        %v1258 = vpop.xlane.xlu0 %1257
        %v1259 = vsel %vm1092, %v1237, 0.0
        %1260 = vadd.xlane.f32.xlu0 %v1259
        %v1261 = vpop.xlane.xlu0 %1260
        %v1262 = vrcp.pop %v1240
        %v1263 = vrcp.pop %v1243
        %v1264 = vrcp.pop %v1246
        %v1265 = vrcp.pop %v1249
        %v1266 = vrcp.pop %v1252
        %v1267 = vrcp.pop %v1255
        %v1268 = vrcp.pop %v1258
        %v1269 = vrcp.pop %v1261
        %v1270 = vmul.f32 %v1223, %v1262
        %v1271 = vmul.f32 %v1225, %v1263
        %v1272 = vmul.f32 %v1227, %v1264
        %v1273 = vmul.f32 %v1229, %v1265
        %v1274 = vmul.f32 %v1231, %v1266
        %v1275 = vmul.f32 %v1233, %v1267
        %v1276 = vmul.f32 %v1235, %v1268
        %v1277 = vmul.f32 %v1237, %v1269
        %v1278 = vpack.c.bf16 %v1271, %v1270
        %v1279 = vpack.c.bf16 %v1273, %v1272
        %v1280 = vpack.c.bf16 %v1275, %v1274
        %v1281 = vpack.c.bf16 %v1277, %v1276
        %v1282 = vpack.c.bf16 %v1031, %v1027
        %v1283 = vpack.c.bf16 %v1041, %v1037
        %v1284 = vpack.c.bf16 %v1051, %v1047
        %v1285 = vpack.c.bf16 %v1061, %v1057
        %v1287 = vsel %vm1092, %v1278, 0
        %v1290 = vsel %vm1092, %v1279, 0
        %v1293 = vsel %vm1092, %v1280, 0
        %v1296 = vsel %vm1092, %v1281, 0
        %1298 = vmatprep.subr.bf16.mxu0 0
        %1299 = vmatpush1.bf16.msra.mxu0 0
        %1300 = vmatprep.subr.bf16.mxu0 0
        %1301 = vmatpush1.bf16.msra.mxu0 0
        %1302 = vmatprep.subr.bf16.mxu0 0
        %1303 = vmatpush1.bf16.msra.mxu0 0
        %1304 = vmatprep.subr.bf16.mxu0 0
        %1305 = vmatpush1.bf16.msra.mxu0 0
        %1306 = vmatprep.subr.bf16.mxu0 0
        %1307 = vmatpush1.bf16.msra.mxu0 %v1285
        %1308 = vmatprep.subr.bf16.mxu0 0
        %1309 = vmatpush1.bf16.msra.mxu0 %v1284
        %1310 = vmatprep.subr.bf16.mxu0 0
        %1311 = vmatpush1.bf16.msra.mxu0 %v1283
        %1312 = vmatprep.subr.bf16.mxu0 0
        %1313 = vmatpush1.bf16.msra.mxu0 %v1282
        %1314 = vmatprep.subr.bf16.mxu0 0
        %1315 = vmatpush2.bf16.msra.mxu0 0
        %1316 = vmatprep.subr.bf16.mxu0 0
        %1317 = vmatpush2.bf16.msra.mxu0 0
        %1318 = vmatprep.subr.bf16.mxu0 0
        %1319 = vmatpush2.bf16.msra.mxu0 0
        %1320 = vmatprep.subr.bf16.mxu0 0
        %1321 = vmatpush2.bf16.msra.mxu0 0
        %1322 = vmatprep.subr.bf16.mxu0 0
        %1323 = vmatpush2.bf16.msra.mxu0 0
        %1324 = vmatprep.subr.bf16.mxu0 0
        %1325 = vmatpush2.bf16.msra.mxu0 0
        %1326 = vmatprep.subr.bf16.mxu0 0
        %1327 = vmatpush2.bf16.msra.mxu0 0
        %1328 = vmatprep.subr.bf16.mxu0 0
        %1329 = vmatpush2.bf16.msra.mxu0 0
        %1330 = vmatprep.mubr.bf16.mxu0 0
        %1331 = vmatmul.mubr.bf16.gmra.mxu0 %v1287
        %v1332 = vpop.f32.mrf.mxu0
        %v1333 = vadd.f32 0.0, %v1332
        %v1334 = vpop.f32.mrf.mxu0
        %v1335 = vpop.f32.mrf.mxu0
        %v1336 = vadd.f32 0.0, %v1335
        %v1337 = vpop.f32.mrf.mxu0
        %1338 = vmatprep.mubr.bf16.mxu0 0
        %1339 = vmatmul.mubr.bf16.gmra.mxu0 %v1290
        %v1340 = vpop.f32.mrf.mxu0
        %v1341 = vadd.f32 0.0, %v1340
        %v1342 = vpop.f32.mrf.mxu0
        %v1343 = vpop.f32.mrf.mxu0
        %v1344 = vadd.f32 0.0, %v1343
        %v1345 = vpop.f32.mrf.mxu0
        %1346 = vmatprep.mubr.bf16.mxu0 0
        %1347 = vmatmul.mubr.bf16.gmra.mxu0 %v1293
        %v1348 = vpop.f32.mrf.mxu0
        %v1349 = vadd.f32 0.0, %v1348
        %v1350 = vpop.f32.mrf.mxu0
        %v1351 = vpop.f32.mrf.mxu0
        %v1352 = vadd.f32 0.0, %v1351
        %v1353 = vpop.f32.mrf.mxu0
        %1354 = vmatprep.mubr.bf16.mxu0 0
        %1355 = vmatmul.mubr.bf16.gmra.mxu0 %v1296
        %v1356 = vpop.f32.mrf.mxu0
        %v1357 = vadd.f32 0.0, %v1356
        %v1358 = vpop.f32.mrf.mxu0
        %v1359 = vpop.f32.mrf.mxu0
        %v1360 = vadd.f32 0.0, %v1359
        %v1361 = vpop.f32.mrf.mxu0
        %1362 = vdwg.mxu0
        %1367 = vrot.lane.b32.xlu0 %v1084, 64
        %v1368 = vpop.permute.xlu0 %1367
        %1369 = vrot.lane.b32.xlu0 %v1085, 64
        %v1370 = vpop.permute.xlu0 %1369
        %1371 = vrot.lane.b32.xlu0 %v1086, 64
        %v1372 = vpop.permute.xlu0 %1371
        %1373 = vrot.lane.b32.xlu0 %v1087, 64
        %v1374 = vpop.permute.xlu0 %1373
        %1379 = vrot.lane.b32.xlu0 %v1088, 64
        %v1380 = vpop.permute.xlu0 %1379
        %1381 = vrot.lane.b32.xlu0 %v1089, 64
        %v1382 = vpop.permute.xlu0 %1381
        %1383 = vrot.lane.b32.xlu0 %v1090, 64
        %v1384 = vpop.permute.xlu0 %1383
        %1385 = vrot.lane.b32.xlu0 %v1091, 64
        %v1386 = vpop.permute.xlu0 %1385
        %v1388 = vsel %vm1092, %v1368, 0
        %v1391 = vsel %vm1092, %v1370, 0
        %v1394 = vsel %vm1092, %v1372, 0
        %v1397 = vsel %vm1092, %v1374, 0
        %v1400 = vsel %vm1092, %v1380, 0
        %v1403 = vsel %vm1092, %v1382, 0
        %v1406 = vsel %vm1092, %v1384, 0
        %v1409 = vsel %vm1092, %v1386, 0
        %1411 = vmatprep.subr.bf16.mxu0 0
        %1412 = vmatpush1.bf16.xpose.msra.mxu0 0
        %1413 = vmatprep.subr.bf16.mxu0 0
        %1414 = vmatpush1.bf16.xpose.msra.mxu0 0
        %1415 = vmatprep.subr.bf16.mxu0 0
        %1416 = vmatpush1.bf16.xpose.msra.mxu0 0
        %1417 = vmatprep.subr.bf16.mxu0 0
        %1418 = vmatpush1.bf16.xpose.msra.mxu0 0
        %1419 = vmatprep.subr.bf16.mxu0 0
        %1420 = vmatpush1.bf16.xpose.msra.mxu0 %v1409
        %1421 = vmatprep.subr.bf16.mxu0 0
        %1422 = vmatpush1.bf16.xpose.msra.mxu0 %v1406
        %1423 = vmatprep.subr.bf16.mxu0 0
        %1424 = vmatpush1.bf16.xpose.msra.mxu0 %v1403
        %1425 = vmatprep.subr.bf16.mxu0 0
        %1426 = vmatpush1.bf16.xpose.msra.mxu0 %v1400
        %1427 = vmatprep.subr.bf16.mxu0 0
        %1428 = vmatpush2.bf16.xpose.msra.mxu0 0
        %1429 = vmatprep.subr.bf16.mxu0 0
        %1430 = vmatpush2.bf16.xpose.msra.mxu0 0
        %1431 = vmatprep.subr.bf16.mxu0 0
        %1432 = vmatpush2.bf16.xpose.msra.mxu0 0
        %1433 = vmatprep.subr.bf16.mxu0 0
        %1434 = vmatpush2.bf16.xpose.msra.mxu0 0
        %1435 = vmatprep.subr.bf16.mxu0 0
        %1436 = vmatpush2.bf16.xpose.msra.mxu0 0
        %1437 = vmatprep.subr.bf16.mxu0 0
        %1438 = vmatpush2.bf16.xpose.msra.mxu0 0
        %1439 = vmatprep.subr.bf16.mxu0 0
        %1440 = vmatpush2.bf16.xpose.msra.mxu0 0
        %1441 = vmatprep.subr.bf16.mxu0 0
        %1442 = vmatpush2.bf16.xpose.msra.mxu0 0
        %1443 = vmatprep.mubr.bf16.mxu0 0
        %1444 = vmatmul.mubr.bf16.gmra.mxu0 %v1388
        %v1445 = vpop.f32.mrf.mxu0
        %v1446 = vadd.f32 0.0, %v1445
        %v1447 = vpop.f32.mrf.mxu0
        %v1448 = vpop.f32.mrf.mxu0
        %v1449 = vadd.f32 0.0, %v1448
        %v1450 = vpop.f32.mrf.mxu0
        %1451 = vmatprep.mubr.bf16.mxu0 0
        %1452 = vmatmul.mubr.bf16.gmra.mxu0 %v1391
        %v1453 = vpop.f32.mrf.mxu0
        %v1454 = vadd.f32 0.0, %v1453
        %v1455 = vpop.f32.mrf.mxu0
        %v1456 = vpop.f32.mrf.mxu0
        %v1457 = vadd.f32 0.0, %v1456
        %v1458 = vpop.f32.mrf.mxu0
        %1459 = vmatprep.mubr.bf16.mxu0 0
        %1460 = vmatmul.mubr.bf16.gmra.mxu0 %v1394
        %v1461 = vpop.f32.mrf.mxu0
        %v1462 = vadd.f32 0.0, %v1461
        %v1463 = vpop.f32.mrf.mxu0
        %v1464 = vpop.f32.mrf.mxu0
        %v1465 = vadd.f32 0.0, %v1464
        %v1466 = vpop.f32.mrf.mxu0
        %1467 = vmatprep.mubr.bf16.mxu0 0
        %1468 = vmatmul.mubr.bf16.gmra.mxu0 %v1397
        %v1469 = vpop.f32.mrf.mxu0
        %v1470 = vadd.f32 0.0, %v1469
        %v1471 = vpop.f32.mrf.mxu0
        %v1472 = vpop.f32.mrf.mxu0
        %v1473 = vadd.f32 0.0, %v1472
        %v1474 = vpop.f32.mrf.mxu0
        %1475 = vdwg.mxu0
        %v1476 = vsel %vm1076, %v1446, -1e+30
        %v1477 = vsel %vm1077, %v1449, -1e+30
        %v1478 = vsel %vm1078, %v1454, -1e+30
        %v1479 = vsel %vm1079, %v1457, -1e+30
        %v1480 = vsel %vm1080, %v1462, -1e+30
        %v1481 = vsel %vm1081, %v1465, -1e+30
        %v1482 = vsel %vm1082, %v1470, -1e+30
        %v1483 = vsel %vm1083, %v1473, -1e+30
        %v1484 = vsel %vm1092, %v1476, -inf
        %1485 = vmax.xlane.f32.xlu0 %v1484
        %v1486 = vpop.xlane.xlu0 %1485
        %v1487 = vsel %vm1092, %v1477, -inf
        %1488 = vmax.xlane.f32.xlu0 %v1487
        %v1489 = vpop.xlane.xlu0 %1488
        %v1490 = vsel %vm1092, %v1478, -inf
        %1491 = vmax.xlane.f32.xlu0 %v1490
        %v1492 = vpop.xlane.xlu0 %1491
        %v1493 = vsel %vm1092, %v1479, -inf
        %1494 = vmax.xlane.f32.xlu0 %v1493
        %v1495 = vpop.xlane.xlu0 %1494
        %v1496 = vsel %vm1092, %v1480, -inf
        %1497 = vmax.xlane.f32.xlu0 %v1496
        %v1498 = vpop.xlane.xlu0 %1497
        %v1499 = vsel %vm1092, %v1481, -inf
        %1500 = vmax.xlane.f32.xlu0 %v1499
        %v1501 = vpop.xlane.xlu0 %1500
        %v1502 = vsel %vm1092, %v1482, -inf
        %1503 = vmax.xlane.f32.xlu0 %v1502
        %v1504 = vpop.xlane.xlu0 %1503
        %v1505 = vsel %vm1092, %v1483, -inf
        %1506 = vmax.xlane.f32.xlu0 %v1505
        %v1507 = vpop.xlane.xlu0 %1506
        %v1508 = vsub.f32 %v1476, %v1486
        %v1509 = vsub.f32 %v1477, %v1489
        %v1510 = vsub.f32 %v1478, %v1492
        %v1511 = vsub.f32 %v1479, %v1495
        %v1512 = vsub.f32 %v1480, %v1498
        %v1513 = vsub.f32 %v1481, %v1501
        %v1514 = vsub.f32 %v1482, %v1504
        %v1515 = vsub.f32 %v1483, %v1507
        %v1516 = vmul.f32 %v1508, 1.442695
        %v1517 = vpow.pop %v1516
        %v1518 = vmul.f32 %v1509, 1.442695
        %v1519 = vpow.pop %v1518
        %v1520 = vmul.f32 %v1510, 1.442695
        %v1521 = vpow.pop %v1520
        %v1522 = vmul.f32 %v1511, 1.442695
        %v1523 = vpow.pop %v1522
        %v1524 = vmul.f32 %v1512, 1.442695
        %v1525 = vpow.pop %v1524
        %v1526 = vmul.f32 %v1513, 1.442695
        %v1527 = vpow.pop %v1526
        %v1528 = vmul.f32 %v1514, 1.442695
        %v1529 = vpow.pop %v1528
        %v1530 = vmul.f32 %v1515, 1.442695
        %v1531 = vpow.pop %v1530
        %v1532 = vsel %vm1092, %v1517, 0.0
        %1533 = vadd.xlane.f32.xlu0 %v1532
        %v1534 = vpop.xlane.xlu0 %1533
        %v1535 = vsel %vm1092, %v1519, 0.0
        %1536 = vadd.xlane.f32.xlu0 %v1535
        %v1537 = vpop.xlane.xlu0 %1536
        %v1538 = vsel %vm1092, %v1521, 0.0
        %1539 = vadd.xlane.f32.xlu0 %v1538
        %v1540 = vpop.xlane.xlu0 %1539
        %v1541 = vsel %vm1092, %v1523, 0.0
        %1542 = vadd.xlane.f32.xlu0 %v1541
        %v1543 = vpop.xlane.xlu0 %1542
        %v1544 = vsel %vm1092, %v1525, 0.0
        %1545 = vadd.xlane.f32.xlu0 %v1544
        %v1546 = vpop.xlane.xlu0 %1545
        %v1547 = vsel %vm1092, %v1527, 0.0
        %1548 = vadd.xlane.f32.xlu0 %v1547
        %v1549 = vpop.xlane.xlu0 %1548
        %v1550 = vsel %vm1092, %v1529, 0.0
        %1551 = vadd.xlane.f32.xlu0 %v1550
        %v1552 = vpop.xlane.xlu0 %1551
        %v1553 = vsel %vm1092, %v1531, 0.0
        %1554 = vadd.xlane.f32.xlu0 %v1553
        %v1555 = vpop.xlane.xlu0 %1554
        %v1556 = vrcp.pop %v1534
        %v1557 = vrcp.pop %v1537
        %v1558 = vrcp.pop %v1540
        %v1559 = vrcp.pop %v1543
        %v1560 = vrcp.pop %v1546
        %v1561 = vrcp.pop %v1549
        %v1562 = vrcp.pop %v1552
        %v1563 = vrcp.pop %v1555
        %v1564 = vmul.f32 %v1517, %v1556
        %v1565 = vmul.f32 %v1519, %v1557
        %v1566 = vmul.f32 %v1521, %v1558
        %v1567 = vmul.f32 %v1523, %v1559
        %v1568 = vmul.f32 %v1525, %v1560
        %v1569 = vmul.f32 %v1527, %v1561
        %v1570 = vmul.f32 %v1529, %v1562
        %v1571 = vmul.f32 %v1531, %v1563
        %v1572 = vpack.c.bf16 %v1565, %v1564
        %v1573 = vpack.c.bf16 %v1567, %v1566
        %v1574 = vpack.c.bf16 %v1569, %v1568
        %v1575 = vpack.c.bf16 %v1571, %v1570
        %1580 = vrot.lane.b32.xlu0 %v1282, 64
        %v1581 = vpop.permute.xlu0 %1580
        %1582 = vrot.lane.b32.xlu0 %v1283, 64
        %v1583 = vpop.permute.xlu0 %1582
        %1584 = vrot.lane.b32.xlu0 %v1284, 64
        %v1585 = vpop.permute.xlu0 %1584
        %1586 = vrot.lane.b32.xlu0 %v1285, 64
        %v1587 = vpop.permute.xlu0 %1586
        %v1593 = vsel %vm1092, %v1572, 0
        %v1596 = vsel %vm1092, %v1573, 0
        %v1599 = vsel %vm1092, %v1574, 0
        %v1602 = vsel %vm1092, %v1575, 0
        %1604 = vmatprep.subr.bf16.mxu0 0
        %1605 = vmatpush1.bf16.msra.mxu0 0
        %1606 = vmatprep.subr.bf16.mxu0 0
        %1607 = vmatpush1.bf16.msra.mxu0 0
        %1608 = vmatprep.subr.bf16.mxu0 0
        %1609 = vmatpush1.bf16.msra.mxu0 0
        %1610 = vmatprep.subr.bf16.mxu0 0
        %1611 = vmatpush1.bf16.msra.mxu0 0
        %1612 = vmatprep.subr.bf16.mxu0 0
        %1613 = vmatpush1.bf16.msra.mxu0 %v1587
        %1614 = vmatprep.subr.bf16.mxu0 0
        %1615 = vmatpush1.bf16.msra.mxu0 %v1585
        %1616 = vmatprep.subr.bf16.mxu0 0
        %1617 = vmatpush1.bf16.msra.mxu0 %v1583
        %1618 = vmatprep.subr.bf16.mxu0 0
        %1619 = vmatpush1.bf16.msra.mxu0 %v1581
        %1620 = vmatprep.subr.bf16.mxu0 0
        %1621 = vmatpush2.bf16.msra.mxu0 0
        %1622 = vmatprep.subr.bf16.mxu0 0
        %1623 = vmatpush2.bf16.msra.mxu0 0
        %1624 = vmatprep.subr.bf16.mxu0 0
        %1625 = vmatpush2.bf16.msra.mxu0 0
        %1626 = vmatprep.subr.bf16.mxu0 0
        %1627 = vmatpush2.bf16.msra.mxu0 0
        %1628 = vmatprep.subr.bf16.mxu0 0
        %1629 = vmatpush2.bf16.msra.mxu0 0
        %1630 = vmatprep.subr.bf16.mxu0 0
        %1631 = vmatpush2.bf16.msra.mxu0 0
        %1632 = vmatprep.subr.bf16.mxu0 0
        %1633 = vmatpush2.bf16.msra.mxu0 0
        %1634 = vmatprep.subr.bf16.mxu0 0
        %1635 = vmatpush2.bf16.msra.mxu0 0
        %1636 = vmatprep.mubr.bf16.mxu0 0
        %1637 = vmatmul.mubr.bf16.gmra.mxu0 %v1593
        %v1638 = vpop.f32.mrf.mxu0
        %v1639 = vadd.f32 0.0, %v1638
        %v1640 = vpop.f32.mrf.mxu0
        %v1641 = vpop.f32.mrf.mxu0
        %v1642 = vadd.f32 0.0, %v1641
        %v1643 = vpop.f32.mrf.mxu0
        %1644 = vmatprep.mubr.bf16.mxu0 0
        %1645 = vmatmul.mubr.bf16.gmra.mxu0 %v1596
        %v1646 = vpop.f32.mrf.mxu0
        %v1647 = vadd.f32 0.0, %v1646
        %v1648 = vpop.f32.mrf.mxu0
        %v1649 = vpop.f32.mrf.mxu0
        %v1650 = vadd.f32 0.0, %v1649
        %v1651 = vpop.f32.mrf.mxu0
        %1652 = vmatprep.mubr.bf16.mxu0 0
        %1653 = vmatmul.mubr.bf16.gmra.mxu0 %v1599
        %v1654 = vpop.f32.mrf.mxu0
        %v1655 = vadd.f32 0.0, %v1654
        %v1656 = vpop.f32.mrf.mxu0
        %v1657 = vpop.f32.mrf.mxu0
        %v1658 = vadd.f32 0.0, %v1657
        %v1659 = vpop.f32.mrf.mxu0
        %1660 = vmatprep.mubr.bf16.mxu0 0
        %1661 = vmatmul.mubr.bf16.gmra.mxu0 %v1602
        %v1662 = vpop.f32.mrf.mxu0
        %v1663 = vadd.f32 0.0, %v1662
        %v1664 = vpop.f32.mrf.mxu0
        %v1665 = vpop.f32.mrf.mxu0
        %v1666 = vadd.f32 0.0, %v1665
        %v1667 = vpop.f32.mrf.mxu0
        %1668 = vdwg.mxu0
        %v1669 = vpack.c.bf16 %v887, %v883
        %v1670 = vpack.c.bf16 %v897, %v893
        %v1671 = vpack.c.bf16 %v907, %v903
        %v1672 = vpack.c.bf16 %v917, %v913
        %v1673 = vpack.c.bf16 %v960, %v956
        %v1674 = vpack.c.bf16 %v970, %v966
        %v1675 = vpack.c.bf16 %v980, %v976
        %v1676 = vpack.c.bf16 %v990, %v986
        %v1678 = vsel %vm1092, %v1669, 0
        %v1681 = vsel %vm1092, %v1670, 0
        %v1684 = vsel %vm1092, %v1671, 0
        %v1687 = vsel %vm1092, %v1672, 0
        %v1690 = vsel %vm1092, %v1673, 0
        %v1693 = vsel %vm1092, %v1674, 0
        %v1696 = vsel %vm1092, %v1675, 0
        %v1699 = vsel %vm1092, %v1676, 0
        %1701 = vmatprep.subr.bf16.mxu0 0
        %1702 = vmatpush1.bf16.xpose.msra.mxu0 0
        %1703 = vmatprep.subr.bf16.mxu0 0
        %1704 = vmatpush1.bf16.xpose.msra.mxu0 0
        %1705 = vmatprep.subr.bf16.mxu0 0
        %1706 = vmatpush1.bf16.xpose.msra.mxu0 0
        %1707 = vmatprep.subr.bf16.mxu0 0
        %1708 = vmatpush1.bf16.xpose.msra.mxu0 0
        %1709 = vmatprep.subr.bf16.mxu0 0
        %1710 = vmatpush1.bf16.xpose.msra.mxu0 %v1699
        %1711 = vmatprep.subr.bf16.mxu0 0
        %1712 = vmatpush1.bf16.xpose.msra.mxu0 %v1696
        %1713 = vmatprep.subr.bf16.mxu0 0
        %1714 = vmatpush1.bf16.xpose.msra.mxu0 %v1693
        %1715 = vmatprep.subr.bf16.mxu0 0
        %1716 = vmatpush1.bf16.xpose.msra.mxu0 %v1690
        %1717 = vmatprep.subr.bf16.mxu0 0
        %1718 = vmatpush2.bf16.xpose.msra.mxu0 0
        %1719 = vmatprep.subr.bf16.mxu0 0
        %1720 = vmatpush2.bf16.xpose.msra.mxu0 0
        %1721 = vmatprep.subr.bf16.mxu0 0
        %1722 = vmatpush2.bf16.xpose.msra.mxu0 0
        %1723 = vmatprep.subr.bf16.mxu0 0
        %1724 = vmatpush2.bf16.xpose.msra.mxu0 0
        %1725 = vmatprep.subr.bf16.mxu0 0
        %1726 = vmatpush2.bf16.xpose.msra.mxu0 0
        %1727 = vmatprep.subr.bf16.mxu0 0
        %1728 = vmatpush2.bf16.xpose.msra.mxu0 0
        %1729 = vmatprep.subr.bf16.mxu0 0
        %1730 = vmatpush2.bf16.xpose.msra.mxu0 0
        %1731 = vmatprep.subr.bf16.mxu0 0
        %1732 = vmatpush2.bf16.xpose.msra.mxu0 0
        %1733 = vmatprep.mubr.bf16.mxu0 0
        %1734 = vmatmul.mubr.bf16.gmra.mxu0 %v1678
        %v1735 = vpop.f32.mrf.mxu0
        %v1736 = vadd.f32 0.0, %v1735
        %v1737 = vpop.f32.mrf.mxu0
        %v1738 = vpop.f32.mrf.mxu0
        %v1739 = vadd.f32 0.0, %v1738
        %v1740 = vpop.f32.mrf.mxu0
        %1741 = vmatprep.mubr.bf16.mxu0 0
        %1742 = vmatmul.mubr.bf16.gmra.mxu0 %v1681
        %v1743 = vpop.f32.mrf.mxu0
        %v1744 = vadd.f32 0.0, %v1743
        %v1745 = vpop.f32.mrf.mxu0
        %v1746 = vpop.f32.mrf.mxu0
        %v1747 = vadd.f32 0.0, %v1746
        %v1748 = vpop.f32.mrf.mxu0
        %1749 = vmatprep.mubr.bf16.mxu0 0
        %1750 = vmatmul.mubr.bf16.gmra.mxu0 %v1684
        %v1751 = vpop.f32.mrf.mxu0
        %v1752 = vadd.f32 0.0, %v1751
        %v1753 = vpop.f32.mrf.mxu0
        %v1754 = vpop.f32.mrf.mxu0
        %v1755 = vadd.f32 0.0, %v1754
        %v1756 = vpop.f32.mrf.mxu0
        %1757 = vmatprep.mubr.bf16.mxu0 0
        %1758 = vmatmul.mubr.bf16.gmra.mxu0 %v1687
        %v1759 = vpop.f32.mrf.mxu0
        %v1760 = vadd.f32 0.0, %v1759
        %v1761 = vpop.f32.mrf.mxu0
        %v1762 = vpop.f32.mrf.mxu0
        %v1763 = vadd.f32 0.0, %v1762
        %v1764 = vpop.f32.mrf.mxu0
        %1765 = vdwg.mxu0
        %v1766 = vsel %vm1076, %v1736, -1e+30
        %v1767 = vsel %vm1077, %v1739, -1e+30
        %v1768 = vsel %vm1078, %v1744, -1e+30
        %v1769 = vsel %vm1079, %v1747, -1e+30
        %v1770 = vsel %vm1080, %v1752, -1e+30
        %v1771 = vsel %vm1081, %v1755, -1e+30
        %v1772 = vsel %vm1082, %v1760, -1e+30
        %v1773 = vsel %vm1083, %v1763, -1e+30
        %v1774 = vsel %vm1092, %v1766, -inf
        %1775 = vmax.xlane.f32.xlu0 %v1774
        %v1776 = vpop.xlane.xlu0 %1775
        %v1777 = vsel %vm1092, %v1767, -inf
        %1778 = vmax.xlane.f32.xlu0 %v1777
        %v1779 = vpop.xlane.xlu0 %1778
        %v1780 = vsel %vm1092, %v1768, -inf
        %1781 = vmax.xlane.f32.xlu0 %v1780
        %v1782 = vpop.xlane.xlu0 %1781
        %v1783 = vsel %vm1092, %v1769, -inf
        %1784 = vmax.xlane.f32.xlu0 %v1783
        %v1785 = vpop.xlane.xlu0 %1784
        %v1786 = vsel %vm1092, %v1770, -inf
        %1787 = vmax.xlane.f32.xlu0 %v1786
        %v1788 = vpop.xlane.xlu0 %1787
        %v1789 = vsel %vm1092, %v1771, -inf
        %1790 = vmax.xlane.f32.xlu0 %v1789
        %v1791 = vpop.xlane.xlu0 %1790
        %v1792 = vsel %vm1092, %v1772, -inf
        %1793 = vmax.xlane.f32.xlu0 %v1792
        %v1794 = vpop.xlane.xlu0 %1793
        %v1795 = vsel %vm1092, %v1773, -inf
        %1796 = vmax.xlane.f32.xlu0 %v1795
        %v1797 = vpop.xlane.xlu0 %1796
        %v1798 = vsub.f32 %v1766, %v1776
        %v1799 = vsub.f32 %v1767, %v1779
        %v1800 = vsub.f32 %v1768, %v1782
        %v1801 = vsub.f32 %v1769, %v1785
        %v1802 = vsub.f32 %v1770, %v1788
        %v1803 = vsub.f32 %v1771, %v1791
        %v1804 = vsub.f32 %v1772, %v1794
        %v1805 = vsub.f32 %v1773, %v1797
        %v1806 = vmul.f32 %v1798, 1.442695
        %v1807 = vpow.pop %v1806
        %v1808 = vmul.f32 %v1799, 1.442695
        %v1809 = vpow.pop %v1808
        %v1810 = vmul.f32 %v1800, 1.442695
        %v1811 = vpow.pop %v1810
        %v1812 = vmul.f32 %v1801, 1.442695
        %v1813 = vpow.pop %v1812
        %v1814 = vmul.f32 %v1802, 1.442695
        %v1815 = vpow.pop %v1814
        %v1816 = vmul.f32 %v1803, 1.442695
        %v1817 = vpow.pop %v1816
        %v1818 = vmul.f32 %v1804, 1.442695
        %v1819 = vpow.pop %v1818
        %v1820 = vmul.f32 %v1805, 1.442695
        %v1821 = vpow.pop %v1820
        %v1822 = vsel %vm1092, %v1807, 0.0
        %1823 = vadd.xlane.f32.xlu0 %v1822
        %v1824 = vpop.xlane.xlu0 %1823
        %v1825 = vsel %vm1092, %v1809, 0.0
        %1826 = vadd.xlane.f32.xlu0 %v1825
        %v1827 = vpop.xlane.xlu0 %1826
        %v1828 = vsel %vm1092, %v1811, 0.0
        %1829 = vadd.xlane.f32.xlu0 %v1828
        %v1830 = vpop.xlane.xlu0 %1829
        %v1831 = vsel %vm1092, %v1813, 0.0
        %1832 = vadd.xlane.f32.xlu0 %v1831
        %v1833 = vpop.xlane.xlu0 %1832
        %v1834 = vsel %vm1092, %v1815, 0.0
        %1835 = vadd.xlane.f32.xlu0 %v1834
        %v1836 = vpop.xlane.xlu0 %1835
        %v1837 = vsel %vm1092, %v1817, 0.0
        %1838 = vadd.xlane.f32.xlu0 %v1837
        %v1839 = vpop.xlane.xlu0 %1838
        %v1840 = vsel %vm1092, %v1819, 0.0
        %1841 = vadd.xlane.f32.xlu0 %v1840
        %v1842 = vpop.xlane.xlu0 %1841
        %v1843 = vsel %vm1092, %v1821, 0.0
        %1844 = vadd.xlane.f32.xlu0 %v1843
        %v1845 = vpop.xlane.xlu0 %1844
        %v1846 = vrcp.pop %v1824
        %v1847 = vrcp.pop %v1827
        %v1848 = vrcp.pop %v1830
        %v1849 = vrcp.pop %v1833
        %v1850 = vrcp.pop %v1836
        %v1851 = vrcp.pop %v1839
        %v1852 = vrcp.pop %v1842
        %v1853 = vrcp.pop %v1845
        %v1854 = vmul.f32 %v1807, %v1846
        %v1855 = vmul.f32 %v1809, %v1847
        %v1856 = vmul.f32 %v1811, %v1848
        %v1857 = vmul.f32 %v1813, %v1849
        %v1858 = vmul.f32 %v1815, %v1850
        %v1859 = vmul.f32 %v1817, %v1851
        %v1860 = vmul.f32 %v1819, %v1852
        %v1861 = vmul.f32 %v1821, %v1853
        %v1862 = vpack.c.bf16 %v1855, %v1854
        %v1863 = vpack.c.bf16 %v1857, %v1856
        %v1864 = vpack.c.bf16 %v1859, %v1858
        %v1865 = vpack.c.bf16 %v1861, %v1860
        %v1866 = vpack.c.bf16 %v1033, %v1029
        %v1867 = vpack.c.bf16 %v1043, %v1039
        %v1868 = vpack.c.bf16 %v1053, %v1049
        %v1869 = vpack.c.bf16 %v1063, %v1059
        %v1871 = vsel %vm1092, %v1862, 0
        %v1874 = vsel %vm1092, %v1863, 0
        %v1877 = vsel %vm1092, %v1864, 0
        %v1880 = vsel %vm1092, %v1865, 0
        %1882 = vmatprep.subr.bf16.mxu0 0
        %1883 = vmatpush1.bf16.msra.mxu0 0
        %1884 = vmatprep.subr.bf16.mxu0 0
        %1885 = vmatpush1.bf16.msra.mxu0 0
        %1886 = vmatprep.subr.bf16.mxu0 0
        %1887 = vmatpush1.bf16.msra.mxu0 0
        %1888 = vmatprep.subr.bf16.mxu0 0
        %1889 = vmatpush1.bf16.msra.mxu0 0
        %1890 = vmatprep.subr.bf16.mxu0 0
        %1891 = vmatpush1.bf16.msra.mxu0 %v1869
        %1892 = vmatprep.subr.bf16.mxu0 0
        %1893 = vmatpush1.bf16.msra.mxu0 %v1868
        %1894 = vmatprep.subr.bf16.mxu0 0
        %1895 = vmatpush1.bf16.msra.mxu0 %v1867
        %1896 = vmatprep.subr.bf16.mxu0 0
        %1897 = vmatpush1.bf16.msra.mxu0 %v1866
        %1898 = vmatprep.subr.bf16.mxu0 0
        %1899 = vmatpush2.bf16.msra.mxu0 0
        %1900 = vmatprep.subr.bf16.mxu0 0
        %1901 = vmatpush2.bf16.msra.mxu0 0
        %1902 = vmatprep.subr.bf16.mxu0 0
        %1903 = vmatpush2.bf16.msra.mxu0 0
        %1904 = vmatprep.subr.bf16.mxu0 0
        %1905 = vmatpush2.bf16.msra.mxu0 0
        %1906 = vmatprep.subr.bf16.mxu0 0
        %1907 = vmatpush2.bf16.msra.mxu0 0
        %1908 = vmatprep.subr.bf16.mxu0 0
        %1909 = vmatpush2.bf16.msra.mxu0 0
        %1910 = vmatprep.subr.bf16.mxu0 0
        %1911 = vmatpush2.bf16.msra.mxu0 0
        %1912 = vmatprep.subr.bf16.mxu0 0
        %1913 = vmatpush2.bf16.msra.mxu0 0
        %1914 = vmatprep.mubr.bf16.mxu0 0
        %1915 = vmatmul.mubr.bf16.gmra.mxu0 %v1871
        %v1916 = vpop.f32.mrf.mxu0
        %v1917 = vadd.f32 0.0, %v1916
        %v1918 = vpop.f32.mrf.mxu0
        %v1919 = vpop.f32.mrf.mxu0
        %v1920 = vadd.f32 0.0, %v1919
        %v1921 = vpop.f32.mrf.mxu0
        %1922 = vmatprep.mubr.bf16.mxu0 0
        %1923 = vmatmul.mubr.bf16.gmra.mxu0 %v1874
        %v1924 = vpop.f32.mrf.mxu0
        %v1925 = vadd.f32 0.0, %v1924
        %v1926 = vpop.f32.mrf.mxu0
        %v1927 = vpop.f32.mrf.mxu0
        %v1928 = vadd.f32 0.0, %v1927
        %v1929 = vpop.f32.mrf.mxu0
        %1930 = vmatprep.mubr.bf16.mxu0 0
        %1931 = vmatmul.mubr.bf16.gmra.mxu0 %v1877
        %v1932 = vpop.f32.mrf.mxu0
        %v1933 = vadd.f32 0.0, %v1932
        %v1934 = vpop.f32.mrf.mxu0
        %v1935 = vpop.f32.mrf.mxu0
        %v1936 = vadd.f32 0.0, %v1935
        %v1937 = vpop.f32.mrf.mxu0
        %1938 = vmatprep.mubr.bf16.mxu0 0
        %1939 = vmatmul.mubr.bf16.gmra.mxu0 %v1880
        %v1940 = vpop.f32.mrf.mxu0
        %v1941 = vadd.f32 0.0, %v1940
        %v1942 = vpop.f32.mrf.mxu0
        %v1943 = vpop.f32.mrf.mxu0
        %v1944 = vadd.f32 0.0, %v1943
        %v1945 = vpop.f32.mrf.mxu0
        %1946 = vdwg.mxu0
        %1951 = vrot.lane.b32.xlu0 %v1669, 64
        %v1952 = vpop.permute.xlu0 %1951
        %1953 = vrot.lane.b32.xlu0 %v1670, 64
        %v1954 = vpop.permute.xlu0 %1953
        %1955 = vrot.lane.b32.xlu0 %v1671, 64
        %v1956 = vpop.permute.xlu0 %1955
        %1957 = vrot.lane.b32.xlu0 %v1672, 64
        %v1958 = vpop.permute.xlu0 %1957
        %1963 = vrot.lane.b32.xlu0 %v1673, 64
        %v1964 = vpop.permute.xlu0 %1963
        %1965 = vrot.lane.b32.xlu0 %v1674, 64
        %v1966 = vpop.permute.xlu0 %1965
        %1967 = vrot.lane.b32.xlu0 %v1675, 64
        %v1968 = vpop.permute.xlu0 %1967
        %1969 = vrot.lane.b32.xlu0 %v1676, 64
        %v1970 = vpop.permute.xlu0 %1969
        %v1972 = vsel %vm1092, %v1952, 0
        %v1975 = vsel %vm1092, %v1954, 0
        %v1978 = vsel %vm1092, %v1956, 0
        %v1981 = vsel %vm1092, %v1958, 0
        %v1984 = vsel %vm1092, %v1964, 0
        %v1987 = vsel %vm1092, %v1966, 0
        %v1990 = vsel %vm1092, %v1968, 0
        %v1993 = vsel %vm1092, %v1970, 0
        %1995 = vmatprep.subr.bf16.mxu0 0
        %1996 = vmatpush1.bf16.xpose.msra.mxu0 0
        %1997 = vmatprep.subr.bf16.mxu0 0
        %1998 = vmatpush1.bf16.xpose.msra.mxu0 0
        %1999 = vmatprep.subr.bf16.mxu0 0
        %2000 = vmatpush1.bf16.xpose.msra.mxu0 0
        %2001 = vmatprep.subr.bf16.mxu0 0
        %2002 = vmatpush1.bf16.xpose.msra.mxu0 0
        %2003 = vmatprep.subr.bf16.mxu0 0
        %2004 = vmatpush1.bf16.xpose.msra.mxu0 %v1993
        %2005 = vmatprep.subr.bf16.mxu0 0
        %2006 = vmatpush1.bf16.xpose.msra.mxu0 %v1990
        %2007 = vmatprep.subr.bf16.mxu0 0
        %2008 = vmatpush1.bf16.xpose.msra.mxu0 %v1987
        %2009 = vmatprep.subr.bf16.mxu0 0
        %2010 = vmatpush1.bf16.xpose.msra.mxu0 %v1984
        %2011 = vmatprep.subr.bf16.mxu0 0
        %2012 = vmatpush2.bf16.xpose.msra.mxu0 0
        %2013 = vmatprep.subr.bf16.mxu0 0
        %2014 = vmatpush2.bf16.xpose.msra.mxu0 0
        %2015 = vmatprep.subr.bf16.mxu0 0
        %2016 = vmatpush2.bf16.xpose.msra.mxu0 0
        %2017 = vmatprep.subr.bf16.mxu0 0
        %2018 = vmatpush2.bf16.xpose.msra.mxu0 0
        %2019 = vmatprep.subr.bf16.mxu0 0
        %2020 = vmatpush2.bf16.xpose.msra.mxu0 0
        %2021 = vmatprep.subr.bf16.mxu0 0
        %2022 = vmatpush2.bf16.xpose.msra.mxu0 0
        %2023 = vmatprep.subr.bf16.mxu0 0
        %2024 = vmatpush2.bf16.xpose.msra.mxu0 0
        %2025 = vmatprep.subr.bf16.mxu0 0
        %2026 = vmatpush2.bf16.xpose.msra.mxu0 0
        %2027 = vmatprep.mubr.bf16.mxu0 0
        %2028 = vmatmul.mubr.bf16.gmra.mxu0 %v1972
        %v2029 = vpop.f32.mrf.mxu0
        %v2030 = vadd.f32 0.0, %v2029
        %v2031 = vpop.f32.mrf.mxu0
        %v2032 = vpop.f32.mrf.mxu0
        %v2033 = vadd.f32 0.0, %v2032
        %v2034 = vpop.f32.mrf.mxu0
        %2035 = vmatprep.mubr.bf16.mxu0 0
        %2036 = vmatmul.mubr.bf16.gmra.mxu0 %v1975
        %v2037 = vpop.f32.mrf.mxu0
        %v2038 = vadd.f32 0.0, %v2037
        %v2039 = vpop.f32.mrf.mxu0
        %v2040 = vpop.f32.mrf.mxu0
        %v2041 = vadd.f32 0.0, %v2040
        %v2042 = vpop.f32.mrf.mxu0
        %2043 = vmatprep.mubr.bf16.mxu0 0
        %2044 = vmatmul.mubr.bf16.gmra.mxu0 %v1978
        %v2045 = vpop.f32.mrf.mxu0
        %v2046 = vadd.f32 0.0, %v2045
        %v2047 = vpop.f32.mrf.mxu0
        %v2048 = vpop.f32.mrf.mxu0
        %v2049 = vadd.f32 0.0, %v2048
        %v2050 = vpop.f32.mrf.mxu0
        %2051 = vmatprep.mubr.bf16.mxu0 0
        %2052 = vmatmul.mubr.bf16.gmra.mxu0 %v1981
        %v2053 = vpop.f32.mrf.mxu0
        %v2054 = vadd.f32 0.0, %v2053
        %v2055 = vpop.f32.mrf.mxu0
        %v2056 = vpop.f32.mrf.mxu0
        %v2057 = vadd.f32 0.0, %v2056
        %v2058 = vpop.f32.mrf.mxu0
        %2059 = vdwg.mxu0
        %v2060 = vsel %vm1076, %v2030, -1e+30
        %v2061 = vsel %vm1077, %v2033, -1e+30
        %v2062 = vsel %vm1078, %v2038, -1e+30
        %v2063 = vsel %vm1079, %v2041, -1e+30
        %v2064 = vsel %vm1080, %v2046, -1e+30
        %v2065 = vsel %vm1081, %v2049, -1e+30
        %v2066 = vsel %vm1082, %v2054, -1e+30
        %v2067 = vsel %vm1083, %v2057, -1e+30
        %v2068 = vsel %vm1092, %v2060, -inf
        %2069 = vmax.xlane.f32.xlu0 %v2068
        %v2070 = vpop.xlane.xlu0 %2069
        %v2071 = vsel %vm1092, %v2061, -inf
        %2072 = vmax.xlane.f32.xlu0 %v2071
        %v2073 = vpop.xlane.xlu0 %2072
        %v2074 = vsel %vm1092, %v2062, -inf
        %2075 = vmax.xlane.f32.xlu0 %v2074
        %v2076 = vpop.xlane.xlu0 %2075
        %v2077 = vsel %vm1092, %v2063, -inf
        %2078 = vmax.xlane.f32.xlu0 %v2077
        %v2079 = vpop.xlane.xlu0 %2078
        %v2080 = vsel %vm1092, %v2064, -inf
        %2081 = vmax.xlane.f32.xlu0 %v2080
        %v2082 = vpop.xlane.xlu0 %2081
        %v2083 = vsel %vm1092, %v2065, -inf
        %2084 = vmax.xlane.f32.xlu0 %v2083
        %v2085 = vpop.xlane.xlu0 %2084
        %v2086 = vsel %vm1092, %v2066, -inf
        %2087 = vmax.xlane.f32.xlu0 %v2086
        %v2088 = vpop.xlane.xlu0 %2087
        %v2089 = vsel %vm1092, %v2067, -inf
        %2090 = vmax.xlane.f32.xlu0 %v2089
        %v2091 = vpop.xlane.xlu0 %2090
        %v2092 = vsub.f32 %v2060, %v2070
        %v2093 = vsub.f32 %v2061, %v2073
        %v2094 = vsub.f32 %v2062, %v2076
        %v2095 = vsub.f32 %v2063, %v2079
        %v2096 = vsub.f32 %v2064, %v2082
        %v2097 = vsub.f32 %v2065, %v2085
        %v2098 = vsub.f32 %v2066, %v2088
        %v2099 = vsub.f32 %v2067, %v2091
        %v2100 = vmul.f32 %v2092, 1.442695
        %v2101 = vpow.pop %v2100
        %v2102 = vmul.f32 %v2093, 1.442695
        %v2103 = vpow.pop %v2102
        %v2104 = vmul.f32 %v2094, 1.442695
        %v2105 = vpow.pop %v2104
        %v2106 = vmul.f32 %v2095, 1.442695
        %v2107 = vpow.pop %v2106
        %v2108 = vmul.f32 %v2096, 1.442695
        %v2109 = vpow.pop %v2108
        %v2110 = vmul.f32 %v2097, 1.442695
        %v2111 = vpow.pop %v2110
        %v2112 = vmul.f32 %v2098, 1.442695
        %v2113 = vpow.pop %v2112
        %v2114 = vmul.f32 %v2099, 1.442695
        %v2115 = vpow.pop %v2114
        %v2116 = vsel %vm1092, %v2101, 0.0
        %2117 = vadd.xlane.f32.xlu0 %v2116
        %v2118 = vpop.xlane.xlu0 %2117
        %v2119 = vsel %vm1092, %v2103, 0.0
        %2120 = vadd.xlane.f32.xlu0 %v2119
        %v2121 = vpop.xlane.xlu0 %2120
        %v2122 = vsel %vm1092, %v2105, 0.0
        %2123 = vadd.xlane.f32.xlu0 %v2122
        %v2124 = vpop.xlane.xlu0 %2123
        %v2125 = vsel %vm1092, %v2107, 0.0
        %2126 = vadd.xlane.f32.xlu0 %v2125
        %v2127 = vpop.xlane.xlu0 %2126
        %v2128 = vsel %vm1092, %v2109, 0.0
        %2129 = vadd.xlane.f32.xlu0 %v2128
        %v2130 = vpop.xlane.xlu0 %2129
        %v2131 = vsel %vm1092, %v2111, 0.0
        %2132 = vadd.xlane.f32.xlu0 %v2131
        %v2133 = vpop.xlane.xlu0 %2132
        %v2134 = vsel %vm1092, %v2113, 0.0
        %2135 = vadd.xlane.f32.xlu0 %v2134
        %v2136 = vpop.xlane.xlu0 %2135
        %v2137 = vsel %vm1092, %v2115, 0.0
        %2138 = vadd.xlane.f32.xlu0 %v2137
        %v2139 = vpop.xlane.xlu0 %2138
        %v2140 = vrcp.pop %v2118
        %v2141 = vrcp.pop %v2121
        %v2142 = vrcp.pop %v2124
        %v2143 = vrcp.pop %v2127
        %v2144 = vrcp.pop %v2130
        %v2145 = vrcp.pop %v2133
        %v2146 = vrcp.pop %v2136
        %v2147 = vrcp.pop %v2139
        %v2148 = vmul.f32 %v2101, %v2140
        %v2149 = vmul.f32 %v2103, %v2141
        %v2150 = vmul.f32 %v2105, %v2142
        %v2151 = vmul.f32 %v2107, %v2143
        %v2152 = vmul.f32 %v2109, %v2144
        %v2153 = vmul.f32 %v2111, %v2145
        %v2154 = vmul.f32 %v2113, %v2146
        %v2155 = vmul.f32 %v2115, %v2147
        %v2156 = vpack.c.bf16 %v2149, %v2148
        %v2157 = vpack.c.bf16 %v2151, %v2150
        %v2158 = vpack.c.bf16 %v2153, %v2152
        %v2159 = vpack.c.bf16 %v2155, %v2154
        %2164 = vrot.lane.b32.xlu0 %v1866, 64
        %v2165 = vpop.permute.xlu0 %2164
        %2166 = vrot.lane.b32.xlu0 %v1867, 64
        %v2167 = vpop.permute.xlu0 %2166
        %2168 = vrot.lane.b32.xlu0 %v1868, 64
        %v2169 = vpop.permute.xlu0 %2168
        %2170 = vrot.lane.b32.xlu0 %v1869, 64
        %v2171 = vpop.permute.xlu0 %2170
        %v2177 = vsel %vm1092, %v2156, 0
        %v2180 = vsel %vm1092, %v2157, 0
        %v2183 = vsel %vm1092, %v2158, 0
        %v2186 = vsel %vm1092, %v2159, 0
        %2188 = vmatprep.subr.bf16.mxu0 0
        %2189 = vmatpush1.bf16.msra.mxu0 0
        %2190 = vmatprep.subr.bf16.mxu0 0
        %2191 = vmatpush1.bf16.msra.mxu0 0
        %2192 = vmatprep.subr.bf16.mxu0 0
        %2193 = vmatpush1.bf16.msra.mxu0 0
        %2194 = vmatprep.subr.bf16.mxu0 0
        %2195 = vmatpush1.bf16.msra.mxu0 0
        %2196 = vmatprep.subr.bf16.mxu0 0
        %2197 = vmatpush1.bf16.msra.mxu0 %v2171
        %2198 = vmatprep.subr.bf16.mxu0 0
        %2199 = vmatpush1.bf16.msra.mxu0 %v2169
        %2200 = vmatprep.subr.bf16.mxu0 0
        %2201 = vmatpush1.bf16.msra.mxu0 %v2167
        %2202 = vmatprep.subr.bf16.mxu0 0
        %2203 = vmatpush1.bf16.msra.mxu0 %v2165
        %2204 = vmatprep.subr.bf16.mxu0 0
        %2205 = vmatpush2.bf16.msra.mxu0 0
        %2206 = vmatprep.subr.bf16.mxu0 0
        %2207 = vmatpush2.bf16.msra.mxu0 0
        %2208 = vmatprep.subr.bf16.mxu0 0
        %2209 = vmatpush2.bf16.msra.mxu0 0
        %2210 = vmatprep.subr.bf16.mxu0 0
        %2211 = vmatpush2.bf16.msra.mxu0 0
        %2212 = vmatprep.subr.bf16.mxu0 0
        %2213 = vmatpush2.bf16.msra.mxu0 0
        %2214 = vmatprep.subr.bf16.mxu0 0
        %2215 = vmatpush2.bf16.msra.mxu0 0
        %2216 = vmatprep.subr.bf16.mxu0 0
        %2217 = vmatpush2.bf16.msra.mxu0 0
        %2218 = vmatprep.subr.bf16.mxu0 0
        %2219 = vmatpush2.bf16.msra.mxu0 0
        %2220 = vmatprep.mubr.bf16.mxu0 0
        %2221 = vmatmul.mubr.bf16.gmra.mxu0 %v2177
        %v2222 = vpop.f32.mrf.mxu0
        %v2223 = vadd.f32 0.0, %v2222
        %v2224 = vpop.f32.mrf.mxu0
        %v2225 = vpop.f32.mrf.mxu0
        %v2226 = vadd.f32 0.0, %v2225
        %v2227 = vpop.f32.mrf.mxu0
        %2228 = vmatprep.mubr.bf16.mxu0 0
        %2229 = vmatmul.mubr.bf16.gmra.mxu0 %v2180
        %v2230 = vpop.f32.mrf.mxu0
        %v2231 = vadd.f32 0.0, %v2230
        %v2232 = vpop.f32.mrf.mxu0
        %v2233 = vpop.f32.mrf.mxu0
        %v2234 = vadd.f32 0.0, %v2233
        %v2235 = vpop.f32.mrf.mxu0
        %2236 = vmatprep.mubr.bf16.mxu0 0
        %2237 = vmatmul.mubr.bf16.gmra.mxu0 %v2183
        %v2238 = vpop.f32.mrf.mxu0
        %v2239 = vadd.f32 0.0, %v2238
        %v2240 = vpop.f32.mrf.mxu0
        %v2241 = vpop.f32.mrf.mxu0
        %v2242 = vadd.f32 0.0, %v2241
        %v2243 = vpop.f32.mrf.mxu0
        %2244 = vmatprep.mubr.bf16.mxu0 0
        %2245 = vmatmul.mubr.bf16.gmra.mxu0 %v2186
        %v2246 = vpop.f32.mrf.mxu0
        %v2247 = vadd.f32 0.0, %v2246
        %v2248 = vpop.f32.mrf.mxu0
        %v2249 = vpop.f32.mrf.mxu0
        %v2250 = vadd.f32 0.0, %v2249
        %v2251 = vpop.f32.mrf.mxu0
        %2252 = vdwg.mxu0
        %2261 = vrot.lane.b32.xlu0 %v1639, 64
        %v2262 = vpop.permute.xlu0 %2261
        %2263 = vrot.lane.b32.xlu0 %v1642, 64
        %v2264 = vpop.permute.xlu0 %2263
        %2265 = vrot.lane.b32.xlu0 %v1647, 64
        %v2266 = vpop.permute.xlu0 %2265
        %2267 = vrot.lane.b32.xlu0 %v1650, 64
        %v2268 = vpop.permute.xlu0 %2267
        %2269 = vrot.lane.b32.xlu0 %v1655, 64
        %v2270 = vpop.permute.xlu0 %2269
        %2271 = vrot.lane.b32.xlu0 %v1658, 64
        %v2272 = vpop.permute.xlu0 %2271
        %2273 = vrot.lane.b32.xlu0 %v1663, 64
        %v2274 = vpop.permute.xlu0 %2273
        %2275 = vrot.lane.b32.xlu0 %v1666, 64
        %v2276 = vpop.permute.xlu0 %2275
        %2293 = vrot.lane.b32.xlu0 %v2223, 64
        %v2294 = vpop.permute.xlu0 %2293
        %2295 = vrot.lane.b32.xlu0 %v2226, 64
        %v2296 = vpop.permute.xlu0 %2295
        %2297 = vrot.lane.b32.xlu0 %v2231, 64
        %v2298 = vpop.permute.xlu0 %2297
        %2299 = vrot.lane.b32.xlu0 %v2234, 64
        %v2300 = vpop.permute.xlu0 %2299
        %2301 = vrot.lane.b32.xlu0 %v2239, 64
        %v2302 = vpop.permute.xlu0 %2301
        %2303 = vrot.lane.b32.xlu0 %v2242, 64
        %v2304 = vpop.permute.xlu0 %2303
        %2305 = vrot.lane.b32.xlu0 %v2247, 64
        %v2306 = vpop.permute.xlu0 %2305
        %2307 = vrot.lane.b32.xlu0 %v2250, 64
        %v2308 = vpop.permute.xlu0 %2307
        %v2317 = vsel %vm1092, %v1333, %v2262
        %v2318 = vsel %vm1092, %v1336, %v2264
        %v2319 = vsel %vm1092, %v1341, %v2266
        %v2320 = vsel %vm1092, %v1344, %v2268
        %v2321 = vsel %vm1092, %v1349, %v2270
        %v2322 = vsel %vm1092, %v1352, %v2272
        %v2323 = vsel %vm1092, %v1357, %v2274
        %v2324 = vsel %vm1092, %v1360, %v2276
        %v2325 = vsel %vm1092, %v1917, %v2294
        %v2326 = vsel %vm1092, %v1920, %v2296
        %v2327 = vsel %vm1092, %v1925, %v2298
        %v2328 = vsel %vm1092, %v1928, %v2300
        %v2329 = vsel %vm1092, %v1933, %v2302
        %v2330 = vsel %vm1092, %v1936, %v2304
        %v2331 = vsel %vm1092, %v1941, %v2306
        %v2332 = vsel %vm1092, %v1944, %v2308
        %v2333 = vpack.c.bf16 %v2318, %v2317
        %v2334 = vpack.c.bf16 %v2326, %v2325
        %v2335 = vpack.c.bf16 %v2320, %v2319
        %v2336 = vpack.c.bf16 %v2328, %v2327
        %v2337 = vpack.c.bf16 %v2322, %v2321
        %v2338 = vpack.c.bf16 %v2330, %v2329
        %v2339 = vpack.c.bf16 %v2324, %v2323
        %v2340 = vpack.c.bf16 %v2332, %v2331
        %v2341 = vld [vmem:[#allocation7] sm:$0xff]
        %v2342 = vld [vmem:[#allocation7 + $0x8] sm:$0xff]
        %v2343 = vld [vmem:[#allocation7 + $0x10] sm:$0xff]
        %v2344 = vld [vmem:[#allocation7 + $0x18] sm:$0xff]
        %v2345 = vld [vmem:[#allocation7 + $0x20] sm:$0xff]
        %v2346 = vld [vmem:[#allocation7 + $0x28] sm:$0xff]
        %v2347 = vld [vmem:[#allocation7 + $0x30] sm:$0xff]
        %v2348 = vld [vmem:[#allocation7 + $0x38] sm:$0xff]
        %v2349 = vld [vmem:[#allocation7 + $0x40] sm:$0xff]
        %v2350 = vld [vmem:[#allocation7 + $0x48] sm:$0xff]
        %v2351 = vld [vmem:[#allocation7 + $0x50] sm:$0xff]
        %v2352 = vld [vmem:[#allocation7 + $0x58] sm:$0xff]
        %v2353 = vld [vmem:[#allocation7 + $0x60] sm:$0xff]
        %v2354 = vld [vmem:[#allocation7 + $0x68] sm:$0xff]
        %v2355 = vld [vmem:[#allocation7 + $0x70] sm:$0xff]
        %v2356 = vld [vmem:[#allocation7 + $0x78] sm:$0xff]
        %v2357 = vld [vmem:[#allocation7 + $0x80] sm:$0xff]
        %v2358 = vld [vmem:[#allocation7 + $0x88] sm:$0xff]
        %v2359 = vld [vmem:[#allocation7 + $0x90] sm:$0xff]
        %v2360 = vld [vmem:[#allocation7 + $0x98] sm:$0xff]
        %v2361 = vld [vmem:[#allocation7 + $0xa0] sm:$0xff]
        %v2362 = vld [vmem:[#allocation7 + $0xa8] sm:$0xff]
        %v2363 = vld [vmem:[#allocation7 + $0xb0] sm:$0xff]
        %v2364 = vld [vmem:[#allocation7 + $0xb8] sm:$0xff]
        %v2365 = vld [vmem:[#allocation7 + $0xc0] sm:$0xff]
        %v2366 = vld [vmem:[#allocation7 + $0xc8] sm:$0xff]
        %v2367 = vld [vmem:[#allocation7 + $0xd0] sm:$0xff]
        %v2368 = vld [vmem:[#allocation7 + $0xd8] sm:$0xff]
        %v2369 = vld [vmem:[#allocation7 + $0xe0] sm:$0xff]
        %v2370 = vld [vmem:[#allocation7 + $0xe8] sm:$0xff]
        %v2371 = vld [vmem:[#allocation7 + $0xf0] sm:$0xff]
        %v2372 = vld [vmem:[#allocation7 + $0xf8] sm:$0xff]
        %v2373 = vld [vmem:[%s3] sm:$0x3]
        %v2375 = vlaneseq
        %v2376 = vshrl.u32 %v2375, 7
        %v2377 = vsub.s32 0, %v2376
        %v2378 = vrot.slane %v2373, %v2377
        %v2379 = vlaneseq
        %v2380 = vshrl.u32 %v2379, 7
        %v2381 = vsub.s32 1, %v2380
        %v2382 = vrot.slane %v2373, %v2381
        %v2417 = vunpack.c.l.b16 %v2341
        %v2418 = vunpack.c.h.b16 %v2341
        %v2419 = vunpack.c.l.b16 %v2342
        %v2420 = vunpack.c.h.b16 %v2342
        %v2421 = vunpack.c.l.b16 %v2343
        %v2422 = vunpack.c.h.b16 %v2343
        %v2423 = vunpack.c.l.b16 %v2344
        %v2424 = vunpack.c.h.b16 %v2344
        %v2425 = vunpack.c.l.b16 %v2345
        %v2426 = vunpack.c.h.b16 %v2345
        %v2427 = vunpack.c.l.b16 %v2346
        %v2428 = vunpack.c.h.b16 %v2346
        %v2429 = vunpack.c.l.b16 %v2347
        %v2430 = vunpack.c.h.b16 %v2347
        %v2431 = vunpack.c.l.b16 %v2348
        %v2432 = vunpack.c.h.b16 %v2348
        %v2433 = vunpack.c.l.b16 %v2349
        %v2434 = vunpack.c.h.b16 %v2349
        %v2435 = vunpack.c.l.b16 %v2350
        %v2436 = vunpack.c.h.b16 %v2350
        %v2437 = vunpack.c.l.b16 %v2351
        %v2438 = vunpack.c.h.b16 %v2351
        %v2439 = vunpack.c.l.b16 %v2352
        %v2440 = vunpack.c.h.b16 %v2352
        %v2441 = vunpack.c.l.b16 %v2353
        %v2442 = vunpack.c.h.b16 %v2353
        %v2443 = vunpack.c.l.b16 %v2354
        %v2444 = vunpack.c.h.b16 %v2354
        %v2445 = vunpack.c.l.b16 %v2355
        %v2446 = vunpack.c.h.b16 %v2355
        %v2447 = vunpack.c.l.b16 %v2356
        %v2448 = vunpack.c.h.b16 %v2356
        %v2449 = vunpack.c.l.b16 %v2357
        %v2450 = vunpack.c.h.b16 %v2357
        %v2451 = vunpack.c.l.b16 %v2358
        %v2452 = vunpack.c.h.b16 %v2358
        %v2453 = vunpack.c.l.b16 %v2359
        %v2454 = vunpack.c.h.b16 %v2359
        %v2455 = vunpack.c.l.b16 %v2360
        %v2456 = vunpack.c.h.b16 %v2360
        %v2457 = vunpack.c.l.b16 %v2361
        %v2458 = vunpack.c.h.b16 %v2361
        %v2459 = vunpack.c.l.b16 %v2362
        %v2460 = vunpack.c.h.b16 %v2362
        %v2461 = vunpack.c.l.b16 %v2363
        %v2462 = vunpack.c.h.b16 %v2363
        %v2463 = vunpack.c.l.b16 %v2364
        %v2464 = vunpack.c.h.b16 %v2364
        %v2465 = vunpack.c.l.b16 %v2365
        %v2466 = vunpack.c.h.b16 %v2365
        %v2467 = vunpack.c.l.b16 %v2366
        %v2468 = vunpack.c.h.b16 %v2366
        %v2469 = vunpack.c.l.b16 %v2367
        %v2470 = vunpack.c.h.b16 %v2367
        %v2471 = vunpack.c.l.b16 %v2368
        %v2472 = vunpack.c.h.b16 %v2368
        %v2473 = vunpack.c.l.b16 %v2369
        %v2474 = vunpack.c.h.b16 %v2369
        %v2475 = vunpack.c.l.b16 %v2370
        %v2476 = vunpack.c.h.b16 %v2370
        %v2477 = vunpack.c.l.b16 %v2371
        %v2478 = vunpack.c.h.b16 %v2371
        %v2479 = vunpack.c.l.b16 %v2372
        %v2480 = vunpack.c.h.b16 %v2372
        %v2481 = vpack.c.b16 %v2419, %v2417
        %v2482 = vpack.c.b16 %v2420, %v2418
        %v2483 = vpack.c.b16 %v2423, %v2421
        %v2484 = vpack.c.b16 %v2424, %v2422
        %v2485 = vpack.c.b16 %v2427, %v2425
        %v2486 = vpack.c.b16 %v2428, %v2426
        %v2487 = vpack.c.b16 %v2431, %v2429
        %v2488 = vpack.c.b16 %v2432, %v2430
        %v2489 = vpack.c.b16 %v2435, %v2433
        %v2490 = vpack.c.b16 %v2436, %v2434
        %v2491 = vpack.c.b16 %v2439, %v2437
        %v2492 = vpack.c.b16 %v2440, %v2438
        %v2493 = vpack.c.b16 %v2443, %v2441
        %v2494 = vpack.c.b16 %v2444, %v2442
        %v2495 = vpack.c.b16 %v2447, %v2445
        %v2496 = vpack.c.b16 %v2448, %v2446
        %v2497 = vpack.c.b16 %v2451, %v2449
        %v2498 = vpack.c.b16 %v2452, %v2450
        %v2499 = vpack.c.b16 %v2455, %v2453
        %v2500 = vpack.c.b16 %v2456, %v2454
        %v2501 = vpack.c.b16 %v2459, %v2457
        %v2502 = vpack.c.b16 %v2460, %v2458
        %v2503 = vpack.c.b16 %v2463, %v2461
        %v2504 = vpack.c.b16 %v2464, %v2462
        %v2505 = vpack.c.b16 %v2467, %v2465
        %v2506 = vpack.c.b16 %v2468, %v2466
        %v2507 = vpack.c.b16 %v2471, %v2469
        %v2508 = vpack.c.b16 %v2472, %v2470
        %v2509 = vpack.c.b16 %v2475, %v2473
        %v2510 = vpack.c.b16 %v2476, %v2474
        %v2511 = vpack.c.b16 %v2479, %v2477
        %v2512 = vpack.c.b16 %v2480, %v2478
        %2545 = vmatprep.subr.bf16.mxu0 %v2496
        %2546 = vmatpush1.bf16.msra.mxu0 %v2495
        %2547 = vmatprep.subr.bf16.mxu0 %v2494
        %2548 = vmatpush1.bf16.msra.mxu0 %v2493
        %2549 = vmatprep.subr.bf16.mxu0 %v2492
        %2550 = vmatpush1.bf16.msra.mxu0 %v2491
        %2551 = vmatprep.subr.bf16.mxu0 %v2490
        %2552 = vmatpush1.bf16.msra.mxu0 %v2489
        %2553 = vmatprep.subr.bf16.mxu0 %v2488
        %2554 = vmatpush1.bf16.msra.mxu0 %v2487
        %2555 = vmatprep.subr.bf16.mxu0 %v2486
        %2556 = vmatpush1.bf16.msra.mxu0 %v2485
        %2557 = vmatprep.subr.bf16.mxu0 %v2484
        %2558 = vmatpush1.bf16.msra.mxu0 %v2483
        %2559 = vmatprep.subr.bf16.mxu0 %v2482
        %2560 = vmatpush1.bf16.msra.mxu0 %v2481
        %2561 = vmatprep.subr.bf16.mxu0 %v2512
        %2562 = vmatpush2.bf16.msra.mxu0 %v2511
        %2563 = vmatprep.subr.bf16.mxu0 %v2510
        %2564 = vmatpush2.bf16.msra.mxu0 %v2509
        %2565 = vmatprep.subr.bf16.mxu0 %v2508
        %2566 = vmatpush2.bf16.msra.mxu0 %v2507
        %2567 = vmatprep.subr.bf16.mxu0 %v2506
        %2568 = vmatpush2.bf16.msra.mxu0 %v2505
        %2569 = vmatprep.subr.bf16.mxu0 %v2504
        %2570 = vmatpush2.bf16.msra.mxu0 %v2503
        %2571 = vmatprep.subr.bf16.mxu0 %v2502
        %2572 = vmatpush2.bf16.msra.mxu0 %v2501
        %2573 = vmatprep.subr.bf16.mxu0 %v2500
        %2574 = vmatpush2.bf16.msra.mxu0 %v2499
        %2575 = vmatprep.subr.bf16.mxu0 %v2498
        %2576 = vmatpush2.bf16.msra.mxu0 %v2497
        %2577 = vmatprep.mubr.bf16.mxu0 %v2334
        %2578 = vmatmul.mubr.bf16.gmra.mxu0 %v2333
        %v2579 = vpop.f32.mrf.mxu0
        %v2580 = vadd.f32 %v2378, %v2579
        %v2581 = vpop.f32.mrf.mxu0
        %v2582 = vadd.f32 %v2382, %v2581
        %v2583 = vpop.f32.mrf.mxu0
        %v2584 = vadd.f32 %v2378, %v2583
        %v2585 = vpop.f32.mrf.mxu0
        %v2586 = vadd.f32 %v2382, %v2585
        %2587 = vmatprep.mubr.bf16.mxu0 %v2336
        %2588 = vmatmul.mubr.bf16.gmra.mxu0 %v2335
        %v2589 = vpop.f32.mrf.mxu0
        %v2590 = vadd.f32 %v2378, %v2589
        %v2591 = vpop.f32.mrf.mxu0
        %v2592 = vadd.f32 %v2382, %v2591
        %v2593 = vpop.f32.mrf.mxu0
        %v2594 = vadd.f32 %v2378, %v2593
        %v2595 = vpop.f32.mrf.mxu0
        %v2596 = vadd.f32 %v2382, %v2595
        %2597 = vmatprep.mubr.bf16.mxu0 %v2338
        %2598 = vmatmul.mubr.bf16.gmra.mxu0 %v2337
        %v2599 = vpop.f32.mrf.mxu0
        %v2600 = vadd.f32 %v2378, %v2599
        %v2601 = vpop.f32.mrf.mxu0
        %v2602 = vadd.f32 %v2382, %v2601
        %v2603 = vpop.f32.mrf.mxu0
        %v2604 = vadd.f32 %v2378, %v2603
        %v2605 = vpop.f32.mrf.mxu0
        %v2606 = vadd.f32 %v2382, %v2605
        %2607 = vmatprep.mubr.bf16.mxu0 %v2340
        %2608 = vmatmul.mubr.bf16.gmra.mxu0 %v2339
        %v2609 = vpop.f32.mrf.mxu0
        %v2610 = vadd.f32 %v2378, %v2609
        %v2611 = vpop.f32.mrf.mxu0
        %v2612 = vadd.f32 %v2382, %v2611
        %v2613 = vpop.f32.mrf.mxu0
        %v2614 = vadd.f32 %v2378, %v2613
        %v2615 = vpop.f32.mrf.mxu0
        %v2616 = vadd.f32 %v2382, %v2615
        %2617 = vdwg.mxu0
        %2618 = vst [vmem:[%s244] sm:$0xff] %v2580
        %2619 = vst [vmem:[%s244 + $0x8] sm:$0xff] %v2582
        %2620 = vst [vmem:[%s244 + $0x10] sm:$0xff] %v2584
        %2621 = vst [vmem:[%s244 + $0x18] sm:$0xff] %v2586
        %2622 = vst [vmem:[%s244 + $0x20] sm:$0xff] %v2590
        %2623 = vst [vmem:[%s244 + $0x28] sm:$0xff] %v2592
        %2624 = vst [vmem:[%s244 + $0x30] sm:$0xff] %v2594
        %2625 = vst [vmem:[%s244 + $0x38] sm:$0xff] %v2596
        %2626 = vst [vmem:[%s244 + $0x40] sm:$0xff] %v2600
        %2627 = vst [vmem:[%s244 + $0x48] sm:$0xff] %v2602
        %2628 = vst [vmem:[%s244 + $0x50] sm:$0xff] %v2604
        %2629 = vst [vmem:[%s244 + $0x58] sm:$0xff] %v2606
        %2630 = vst [vmem:[%s244 + $0x60] sm:$0xff] %v2610
        %2631 = vst [vmem:[%s244 + $0x68] sm:$0xff] %v2612
        %2632 = vst [vmem:[%s244 + $0x70] sm:$0xff] %v2614
        %2633 = vst [vmem:[%s244 + $0x78] sm:$0xff] %v2616
        %s2634 = sand.u32 %s119, 1
        %s2635 = scalar_lea.sflag [#allocation4], %s2634
        %s2636 = sand.u32 %s119, 1
        %s2637 = smul.addr %s2636, 128
        %s2638 = scalar_lea.vmem [#allocation8], %s2637
        // Predicated region
        $region49: #{tpu_custom_call.1} parent=35 // pred_check
          %p2639 = pneg %p129
        $region50: #{tpu_custom_call.1} parent=35 // pred_check_branch
          %2641 = sbr.rel (%p2639) target = $region52
        $region51: #{tpu_custom_call.1} parent=35 // pred_region
          %s2643 = ssub.s32 2048, 2048
          %2644 = vsyncadd %s2635, %s2643
          %s2645 = smul.addr %s22, 16
          %s2646 = smul.addr %s2645, 128
          %s2647 = scalar_lea.hbm %s4, %s2646
          %s2648 = sshll.u32 %s2638, 4
          %s2649 = int_to_ptr.vmem [resolvable:$true] %s2648
          %2654 = dma.vmem_to_hbm [thread:$0]  %s2649, 2048, %s2647, %s2635, 256, 256, 16
        $region52: #{tpu_custom_call.1} parent=35 // pred_fallthru
          _
      $region36: #{tpu_custom_call.1} parent=5 // pred_fallthru
        _
      %p2655 = scmp.le.s32.totalorder 2, %s17
      // Predicated region
      $region53: #{tpu_custom_call.1} parent=5 // pred_check
        %p2656 = pneg %p2655
      $region54: #{tpu_custom_call.1} parent=5 // pred_check_branch
        %2658 = sbr.rel (%p2656) target = $region56
      $region55: #{tpu_custom_call.1} parent=5 // pred_region
        %s2659 = ssub.s32 %s17, 2
        // Predicated region
        $region57: #{tpu_custom_call.1} parent=55 // pred_check
          %p2660 = pneg %p135
        $region58: #{tpu_custom_call.1} parent=55 // pred_check_branch
          %2662 = sbr.rel (%p2660) target = $region60
        $region59: #{tpu_custom_call.1} parent=55 // pred_region
          %s2663 = sand.u32 %s120, 1
          %s2664 = scalar_lea.sflag [#allocation4], %s2663
          %s2665 = sand.u32 %s120, 1
          %s2666 = smul.addr %s2665, 128
          %s2667 = scalar_lea.vmem [#allocation8], %s2666
          %2668 = dma.done %s2664, 2048
        $region60: #{tpu_custom_call.1} parent=55 // pred_fallthru
          _
      $region56: #{tpu_custom_call.1} parent=5 // pred_fallthru
        _
    $region6: #{tpu_custom_call.1} parent=1 // loop_footer
      %s21 = sadd.s32 1, %s17
    $region7: #{tpu_custom_call.1} parent=1 // loop_footer_branch
      %16 = sbr.rel target = $region3
    $region8: #{tpu_custom_call.1} parent=1 // loop_exit
      _
    %2669 = vsyncpa [#allocation3], 1
    %s2670 = scalar_lea.sflag [#allocation3], 1
    %2671 = vsyncpa %s2670, 1
    %2672 = vsyncpa [#allocation6], 1
    %2673 = vsyncpa [#allocation4], 1
    %s2674 = scalar_lea.sflag [#allocation4], 1
    %2675 = vsyncpa %s2674, 1

</llo_original>
